<compile_context>
chip_gen: v7x
topology: tpu7x:2x2x1
jax: 0.10.0
libtpu: 0.0.40
codegen_flags: <defaults>
</compile_context>

<pallas_src>
import jax
import jax.numpy as jnp
from jax.experimental import pallas as pl
from jax.experimental.pallas import tpu as pltpu

# Small-shape demo dims (structure matches the module; original sizes in comments).
HIDDEN = 64          # stands in for hidden=512
IMG_FEAT_C = 32      # stands in for AlexNet's 256 conv channels
POOL = 6             # AdaptiveAvgPool2d((6, 6))
F_IMG = IMG_FEAT_C * POOL * POOL     # stands in for 256*6*6 = 9216
IMG_FC1 = 256        # stands in for 4096
IMG_FC2 = 128        # stands in for 1024
OUT_PAD = 128        # q head padded to a full lane group for a dense store
TN_FC1 = 128         # image_fc1 N-tile (use 512 at production size; multiple of 128)


def _make_bias_layout():
    # bi1 is streamed with its tile (in the scale+bias slab); the rest are packed
    # into one lane-aligned f32 vector, each segment starting at a 128 multiple.
    segs = (("bi2", IMG_FC2), ("bi3", HIDDEN), ("bn1", HIDDEN),
            ("bn2", HIDDEN), ("b1", HIDDEN), ("bq", OUT_PAD))
    layout, off = {}, 0
    for name, n in segs:
        layout[name] = (off, n)
        off += -(-n // 128) * 128
    return layout, off


_BIAS_LAYOUT, BIAS_LEN = _make_bias_layout()   # BIAS_LEN == 768


def _predictor_kernel(inp_ref, img_ref, wi1_ref, sb1_ref,
                      wi2_ref, wi3_ref, wn1_ref, wn2_ref, w1_ref, wq_ref,
                      bias_ref, out_ref, h_ref):
    f32 = jnp.float32
    n = pl.program_id(0)
    nt = pl.num_programs(0)

    # ---- streamed image_fc1 N-tile: h[:, tile] = relu(img @ W1[:, tile]*s + b) ----
    # wi1 tile is int8 (weight-only quant); dequant = cast + per-column scale.
    w_tile = wi1_ref[...].astype(jnp.bfloat16)
    part = jnp.dot(img_ref[...], w_tile, preferred_element_type=f32)
    part = part * sb1_ref[0:1, :] + sb1_ref[1:2, :]          # scale row, bias row
    start = pl.multiple_of(n * TN_FC1, TN_FC1)
    h_ref[:, pl.ds(start, TN_FC1)] = jnp.maximum(part, 0.0)

    # ---- rest of the network, once all layer-1 tiles have landed in scratch ----
    @pl.when(n == nt - 1)
    def _():
        def dot(x, w):
            # MXU matmul: bf16 operands, f32 accumulation.
            return jnp.dot(x.astype(w.dtype), w, preferred_element_type=f32)

        def bias(name):
            off, sz = _BIAS_LAYOUT[name]
            return bias_ref[:, off:off + sz]                  # (1, sz) f32

        # image branch tail: relu(fc2) -> fc3 (no activation)
        h = h_ref[...]
        h2 = jnp.maximum(dot(h, wi2_ref[...]) + bias("bi2"), 0.0)
        img_b = dot(h2, wi3_ref[...]) + bias("bi3")

        # proprio/input branch: two linear layers, no activation (per spec)
        u = dot(inp_ref[...], wn1_ref[...]) + bias("bn1")
        u = dot(u, wn2_ref[...]) + bias("bn2")

        # fc1(cat([input, img], dim=1)) as a split matmul (no in-kernel concat)
        w1 = w1_ref[...]                                      # (2*HIDDEN, HIDDEN) bf16
        x = dot(u, w1[:HIDDEN, :]) + dot(img_b, w1[HIDDEN:, :]) + bias("b1")
        x = jnp.maximum(x, 0.0)

        # q head, lane-dense (padded) output, sigmoid
        logits = dot(x, wq_ref[...]) + bias("bq")
        out_ref[...] = jax.nn.sigmoid(logits).astype(out_ref.dtype)


def _streamed_wi1_spec(nt):
    """Deeper prefetch on the only streamed operand; fall back to the default
    double-buffer if this JAX build lacks BlockSpec(pipeline_mode=...)."""
    try:
        return pl.BlockSpec((F_IMG, TN_FC1), lambda n: (0, n),
                            pipeline_mode=pl.Buffered(min(3, nt)))
    except TypeError:
        return pl.BlockSpec((F_IMG, TN_FC1), lambda n: (0, n))


def _adaptive_avg_pool(x, out_hw):
    """nn.AdaptiveAvgPool2d((6,6)) for spatial sizes divisible by 6 (identity for
    real AlexNet-224 features, which are already 6x6)."""
    B, C, H, W = x.shape
    # TODO(synk): general adaptive pooling with uneven bins is not implemented.
    assert H % out_hw == 0 and W % out_hw == 0
    x = x.reshape(B, C, out_hw, H // out_hw, out_hw, W // out_hw)
    return x.mean(axis=(3, 5))


def open_loop_image_predictor_forward(inp, conv_feat, params, output_num=1):
    """inp: (B, input_num) f32, conv_feat: (B, C, Hf, Wf) f32 -> score (B, output_num)."""
    B = inp.shape[0]
    input_num = inp.shape[1]
    img = _adaptive_avg_pool(conv_feat, POOL)                 # (B, C, 6, 6)
    img = img.reshape(B, -1).astype(jnp.bfloat16)             # (B, C*36), half the DMA
    inp_bf = inp.astype(jnp.bfloat16)

    nt = IMG_FC1 // TN_FC1
    inputs = (inp_bf, img,
              params["wi1_q"], params["sb1"],
              params["wi2"], params["wi3"],
              params["wn1"], params["wn2"], params["w1"], params["wq"],
              params["bias"])

    in_specs = [
        pl.BlockSpec((B, input_num), lambda n: (0, 0)),           # inp      (resident)
        pl.BlockSpec((B, F_IMG), lambda n: (0, 0)),               # img      (resident)
        _streamed_wi1_spec(nt),                                   # wi1 int8 (streamed)
        pl.BlockSpec((2, TN_FC1), lambda n: (0, n)),              # scale+bias tile
        pl.BlockSpec((IMG_FC1, IMG_FC2), lambda n: (0, 0)),       # wi2      (resident)
        pl.BlockSpec((IMG_FC2, HIDDEN), lambda n: (0, 0)),        # wi3
        pl.BlockSpec((input_num, HIDDEN), lambda n: (0, 0)),      # wn1
        pl.BlockSpec((HIDDEN, HIDDEN), lambda n: (0, 0)),         # wn2
        pl.BlockSpec((2 * HIDDEN, HIDDEN), lambda n: (0, 0)),     # w1 (stacked fc1)
        pl.BlockSpec((HIDDEN, OUT_PAD), lambda n: (0, 0)),        # wq (padded)
        pl.BlockSpec((1, BIAS_LEN), lambda n: (0, 0)),            # packed biases
    ]
    out_specs = pl.BlockSpec((B, OUT_PAD), lambda n: (0, 0))

    flops = 2 * B * (F_IMG * IMG_FC1 + IMG_FC1 * IMG_FC2 + IMG_FC2 * HIDDEN
                     + input_num * HIDDEN + HIDDEN * HIDDEN
                     + 2 * HIDDEN * HIDDEN + HIDDEN * OUT_PAD)
    bytes_accessed = int(sum(int(x.size) * x.dtype.itemsize for x in inputs)
                         + B * OUT_PAD * 4)
    cost = pl.CostEstimate(flops=int(flops), transcendentals=int(B * OUT_PAD),
                           bytes_accessed=bytes_accessed)

    out = pl.pallas_call(
        _predictor_kernel,
        out_shape=jax.ShapeDtypeStruct((B, OUT_PAD), jnp.float32),
        grid=(nt,),
        in_specs=in_specs,
        out_specs=out_specs,
        scratch_shapes=[pltpu.VMEM((B, IMG_FC1), jnp.float32)],   # layer-1 activations
        compiler_params=pltpu.CompilerParams(
            dimension_semantics=("arbitrary",),       # tail depends on all wi1 tiles
            vmem_limit_bytes=48 * 1024 * 1024),       # headroom; fits v7x's 64 MiB
        cost_estimate=cost,
    )(*inputs)
    return out[:, :output_num]


def init_params(key, input_num, output_num=1):
    """PyTorch-style uniform(-1/sqrt(fan_in)) init, then packed for the kernel."""
    ks = jax.random.split(key, 14)

    def u(k, shape, fan_in):
        s = 1.0 / jnp.sqrt(fan_in)
        return jax.random.uniform(k, shape, jnp.float32, -s, s)

    wi1 = u(ks[0], (F_IMG, IMG_FC1), F_IMG);        bi1 = u(ks[1], (IMG_FC1,), F_IMG)
    wi2 = u(ks[2], (IMG_FC1, IMG_FC2), IMG_FC1);    bi2 = u(ks[3], (IMG_FC2,), IMG_FC1)
    wi3 = u(ks[4], (IMG_FC2, HIDDEN), IMG_FC2);     bi3 = u(ks[5], (HIDDEN,), IMG_FC2)
    wn1 = u(ks[6], (input_num, HIDDEN), input_num); bn1 = u(ks[7], (HIDDEN,), input_num)
    wn2 = u(ks[8], (HIDDEN, HIDDEN), HIDDEN);       bn2 = u(ks[9], (HIDDEN,), HIDDEN)
    # fc1 weight stored stacked: rows [:HIDDEN] multiply the input-branch,
    # rows [HIDDEN:] multiply the image-branch (== torch.cat([input, img], 1)).
    w1 = u(ks[10], (2 * HIDDEN, HIDDEN), 2 * HIDDEN)
    b1 = u(ks[11], (HIDDEN,), 2 * HIDDEN)
    wq = u(ks[12], (HIDDEN, output_num), HIDDEN)
    bq = u(ks[13], (output_num,), HIDDEN)

    # Weight-only int8 quantization of the dominant image_fc1 weight:
    # per-output-column scale, packed with bi1 into one (2, IMG_FC1) slab.
    col_max = jnp.max(jnp.abs(wi1), axis=0)
    scale = jnp.where(col_max > 0, col_max / 127.0, 1.0)
    wi1_q = jnp.clip(jnp.round(wi1 / scale[None, :]), -127, 127).astype(jnp.int8)
    sb1 = jnp.stack([scale, bi1], axis=0).astype(jnp.float32)     # (2, IMG_FC1)

    # Pack: zero-pad q head to 128 lanes; concat remaining biases into one vector.
    wq_pad = jnp.zeros((HIDDEN, OUT_PAD), jnp.float32).at[:, :output_num].set(wq)
    bias = jnp.zeros((1, BIAS_LEN), jnp.float32)
    for name, vec in (("bi2", bi2), ("bi3", bi3), ("bn1", bn1),
                      ("bn2", bn2), ("b1", b1), ("bq", bq)):
        off, _ = _BIAS_LAYOUT[name]
        bias = bias.at[0, off:off + vec.shape[0]].set(vec)

    bf16 = jnp.bfloat16
    return {
        "wi1_q": wi1_q, "sb1": sb1,
        "wi2": wi2.astype(bf16), "wi3": wi3.astype(bf16),
        "wn1": wn1.astype(bf16), "wn2": wn2.astype(bf16),
        "w1": w1.astype(bf16), "wq": wq_pad.astype(bf16),
        "bias": bias,
    }


def reference_forward(inp, conv_feat, p, output_num=1):
    """Pure-JAX f32 reference using the same stored (int8/bf16) weights, upcast."""
    f32 = jnp.float32

    def b(name):
        off, n = _BIAS_LAYOUT[name]
        return p["bias"][:, off:off + n]

    img = _adaptive_avg_pool(conv_feat, POOL).reshape(inp.shape[0], -1).astype(f32)
    wi1 = p["wi1_q"].astype(f32) * p["sb1"][0:1, :]          # dequantized image_fc1
    h = jax.nn.relu(img @ wi1 + p["sb1"][1:2, :])
    h = jax.nn.relu(h @ p["wi2"].astype(f32) + b("bi2"))
    img_b = h @ p["wi3"].astype(f32) + b("bi3")
    u = inp @ p["wn1"].astype(f32) + b("bn1")
    u = u @ p["wn2"].astype(f32) + b("bn2")
    x = jax.nn.relu(jnp.concatenate([u, img_b], axis=1) @ p["w1"].astype(f32) + b("b1"))
    logits = x @ p["wq"].astype(f32)[:, :output_num] + b("bq")[:, :output_num]
    return jax.nn.sigmoid(logits)


if __name__ == "__main__":
    key = jax.random.PRNGKey(0)
    k_inp, k_img, k_par = jax.random.split(key, 3)

    B, INPUT_NUM, OUTPUT_NUM = 8, 16, 1
    H_FEAT = W_FEAT = 12   # conv feature-map spatial size (adaptive-pooled to 6x6)

    inp = jax.random.normal(k_inp, (B, INPUT_NUM), jnp.float32)
    conv_feat = jax.random.normal(k_img, (B, IMG_FEAT_C, H_FEAT, W_FEAT), jnp.float32)
    params = init_params(k_par, INPUT_NUM, OUTPUT_NUM)

    score = open_loop_image_predictor_forward(inp, conv_feat, params, OUTPUT_NUM)
    jax.block_until_ready(score)

    ref = reference_forward(inp, conv_feat, params, OUTPUT_NUM)
    assert score.shape == (B, OUTPUT_NUM), f"bad shape {score.shape}"
    max_err = float(jnp.max(jnp.abs(score - ref)))
    assert jnp.allclose(score, ref, atol=2e-2), f"score mismatch, max abs err {max_err}"

    print("KERNEL_OK")
</pallas_src>

<mosaic_0001>
module attributes {stable_mosaic.version = 11 : i64} {
  func.func @_predictor_kernel(%arg0: i32, %arg1: memref<8x16xbf16, #tpu.memory_space<vmem>>, %arg2: memref<8x1152xbf16, #tpu.memory_space<vmem>>, %arg3: memref<1152x128xi8, #tpu.memory_space<vmem>>, %arg4: memref<2x128xf32, #tpu.memory_space<vmem>>, %arg5: memref<256x128xbf16, #tpu.memory_space<vmem>>, %arg6: memref<128x64xbf16, #tpu.memory_space<vmem>>, %arg7: memref<16x64xbf16, #tpu.memory_space<vmem>>, %arg8: memref<64x64xbf16, #tpu.memory_space<vmem>>, %arg9: memref<128x64xbf16, #tpu.memory_space<vmem>>, %arg10: memref<64x128xbf16, #tpu.memory_space<vmem>>, %arg11: memref<1x768xf32, #tpu.memory_space<vmem>>, %arg12: memref<8x128xf32, #tpu.memory_space<vmem>>, %arg13: memref<8x256xf32, #tpu.memory_space<vmem>>) attributes {dimension_semantics = [#tpu.dimension_semantics<arbitrary>], iteration_bounds = array<i64: 2>, scalar_prefetch = 0 : i64, scratch_operands = 1 : i64, tpu.core_type = #tpu.core_type<tc>, window_params = [{pipeline_mode = #tpu.pipeline_mode<synchronous>, transform_indices = @transform_0, window_bounds = array<i64: 8, 16>}, {pipeline_mode = #tpu.pipeline_mode<synchronous>, transform_indices = @transform_1, window_bounds = array<i64: 8, 1152>}, {pipeline_mode = #tpu.pipeline_mode<double_buffered>, transform_indices = @transform_2, window_bounds = array<i64: 1152, 128>}, {transform_indices = @transform_3, window_bounds = array<i64: 2, 128>}, {pipeline_mode = #tpu.pipeline_mode<synchronous>, transform_indices = @transform_4, window_bounds = array<i64: 256, 128>}, {pipeline_mode = #tpu.pipeline_mode<synchronous>, transform_indices = @transform_5, window_bounds = array<i64: 128, 64>}, {pipeline_mode = #tpu.pipeline_mode<synchronous>, transform_indices = @transform_6, window_bounds = array<i64: 16, 64>}, {pipeline_mode = #tpu.pipeline_mode<synchronous>, transform_indices = @transform_7, window_bounds = array<i64: 64, 64>}, {pipeline_mode = #tpu.pipeline_mode<synchronous>, transform_indices = @transform_8, window_bounds = array<i64: 128, 64>}, {pipeline_mode = #tpu.pipeline_mode<synchronous>, transform_indices = @transform_9, window_bounds = array<i64: 64, 128>}, {pipeline_mode = #tpu.pipeline_mode<synchronous>, transform_indices = @transform_10, window_bounds = array<i64: 1, 768>}, {pipeline_mode = #tpu.pipeline_mode<synchronous>, transform_indices = @transform_11, window_bounds = array<i64: 8, 128>}]} {
    %c0 = arith.constant 0 : index
    %c0_0 = arith.constant 0 : index
    %0 = vector.load %arg3[%c0, %c0_0] : memref<1152x128xi8, #tpu.memory_space<vmem>>, vector<1152x128xi8>
    %1 = arith.sitofp %0 : vector<1152x128xi8> to vector<1152x128xbf16>
    %c0_1 = arith.constant 0 : index
    %c0_2 = arith.constant 0 : index
    %2 = vector.load %arg2[%c0_1, %c0_2] : memref<8x1152xbf16, #tpu.memory_space<vmem>>, vector<8x1152xbf16>
    %cst = arith.constant dense<0.000000e+00> : vector<8x128xf32>
    %3 = tpu.matmul %2, %1, %cst {dimension_numbers = #tpu.dot_dimension_numbers<[1], [0], [0], [1], [0, 0, 1, 1], [], []>} : vector<8x1152xbf16>, vector<1152x128xbf16>, vector<8x128xf32> -> vector<8x128xf32>
    %c0_3 = arith.constant 0 : index
    %c0_4 = arith.constant 0 : index
    %4 = vector.load %arg4[%c0_3, %c0_4] : memref<2x128xf32, #tpu.memory_space<vmem>>, vector<1x128xf32>
    %5 = vector.broadcast %4 : vector<1x128xf32> to vector<8x128xf32>
    %6 = arith.mulf %3, %5 : vector<8x128xf32>
    %c1 = arith.constant 1 : index
    %c0_5 = arith.constant 0 : index
    %7 = vector.load %arg4[%c1, %c0_5] : memref<2x128xf32, #tpu.memory_space<vmem>>, vector<1x128xf32>
    %8 = vector.broadcast %7 : vector<1x128xf32> to vector<8x128xf32>
    %9 = arith.addf %6, %8 : vector<8x128xf32>
    %c128_i32 = arith.constant 128 : i32
    %10 = arith.muli %arg0, %c128_i32 : i32
    %11 = tpu.assume_multiple %10, 128 : i32
    %cst_6 = arith.constant 0.000000e+00 : f32
    %12 = vector.broadcast %cst_6 : f32 to vector<8x128xf32>
    %13 = arith.maximumf %9, %12 : vector<8x128xf32>
    %c0_7 = arith.constant 0 : index
    %14 = arith.index_cast %11 : i32 to index
    %15 = vector.load %arg13[%c0_7, %14] : memref<8x256xf32, #tpu.memory_space<vmem>>, vector<8x128xf32>
    tpu.vector_store %arg13[%c0_7, %14], %13 {strides = array<i32>} : memref<8x256xf32, #tpu.memory_space<vmem>>, vector<8x128xf32>,
    %c1_i32 = arith.constant 1 : i32
    %16 = arith.cmpi eq, %arg0, %c1_i32 : i32
    %17 = arith.extui %16 : i1 to i32
    %c0_i32 = arith.constant 0 : i32
    %18 = arith.cmpi ne, %17, %c0_i32 : i32
    scf.if %18 {
      %c0_8 = arith.constant 0 : index
      %c0_9 = arith.constant 0 : index
      %19 = vector.load %arg13[%c0_8, %c0_9] : memref<8x256xf32, #tpu.memory_space<vmem>>, vector<8x256xf32>
      %c0_10 = arith.constant 0 : index
      %c0_11 = arith.constant 0 : index
      %20 = vector.load %arg5[%c0_10, %c0_11] : memref<256x128xbf16, #tpu.memory_space<vmem>>, vector<256x128xbf16>
      %21 = arith.truncf %19 : vector<8x256xf32> to vector<8x256xbf16>
      %cst_12 = arith.constant dense<0.000000e+00> : vector<8x128xf32>
      %22 = tpu.matmul %21, %20, %cst_12 {dimension_numbers = #tpu.dot_dimension_numbers<[1], [0], [0], [1], [0, 0, 1, 1], [], []>} : vector<8x256xbf16>, vector<256x128xbf16>, vector<8x128xf32> -> vector<8x128xf32>
      %c0_13 = arith.constant 0 : index
      %c0_14 = arith.constant 0 : index
      %23 = vector.load %arg11[%c0_13, %c0_14] : memref<1x768xf32, #tpu.memory_space<vmem>>, vector<1x128xf32>
      %24 = vector.broadcast %23 : vector<1x128xf32> to vector<8x128xf32>
      %25 = arith.addf %22, %24 : vector<8x128xf32>
      %cst_15 = arith.constant 0.000000e+00 : f32
      %26 = vector.broadcast %cst_15 : f32 to vector<8x128xf32>
      %27 = arith.maximumf %25, %26 : vector<8x128xf32>
      %c0_16 = arith.constant 0 : index
      %c0_17 = arith.constant 0 : index
      %28 = vector.load %arg6[%c0_16, %c0_17] : memref<128x64xbf16, #tpu.memory_space<vmem>>, vector<128x64xbf16>
      %29 = arith.truncf %27 : vector<8x128xf32> to vector<8x128xbf16>
      %cst_18 = arith.constant dense<0.000000e+00> : vector<8x64xf32>
      %30 = tpu.matmul %29, %28, %cst_18 {dimension_numbers = #tpu.dot_dimension_numbers<[1], [0], [0], [1], [0, 0, 1, 1], [], []>} : vector<8x128xbf16>, vector<128x64xbf16>, vector<8x64xf32> -> vector<8x64xf32>
      %c0_19 = arith.constant 0 : index
      %c128 = arith.constant 128 : index
      %31 = vector.load %arg11[%c0_19, %c128] : memref<1x768xf32, #tpu.memory_space<vmem>>, vector<1x64xf32>
      %32 = vector.broadcast %31 : vector<1x64xf32> to vector<8x64xf32>
      %33 = arith.addf %30, %32 : vector<8x64xf32>
      %c0_20 = arith.constant 0 : index
      %c0_21 = arith.constant 0 : index
      %34 = vector.load %arg1[%c0_20, %c0_21] : memref<8x16xbf16, #tpu.memory_space<vmem>>, vector<8x16xbf16>
      %c0_22 = arith.constant 0 : index
      %c0_23 = arith.constant 0 : index
      %35 = vector.load %arg7[%c0_22, %c0_23] : memref<16x64xbf16, #tpu.memory_space<vmem>>, vector<16x64xbf16>
      %cst_24 = arith.constant dense<0.000000e+00> : vector<8x64xf32>
      %36 = tpu.matmul %34, %35, %cst_24 {dimension_numbers = #tpu.dot_dimension_numbers<[1], [0], [0], [1], [0, 0, 1, 1], [], []>} : vector<8x16xbf16>, vector<16x64xbf16>, vector<8x64xf32> -> vector<8x64xf32>
      %c0_25 = arith.constant 0 : index
      %c256 = arith.constant 256 : index
      %37 = vector.load %arg11[%c0_25, %c256] : memref<1x768xf32, #tpu.memory_space<vmem>>, vector<1x64xf32>
      %38 = vector.broadcast %37 : vector<1x64xf32> to vector<8x64xf32>
      %39 = arith.addf %36, %38 : vector<8x64xf32>
      %c0_26 = arith.constant 0 : index
      %c0_27 = arith.constant 0 : index
      %40 = vector.load %arg8[%c0_26, %c0_27] : memref<64x64xbf16, #tpu.memory_space<vmem>>, vector<64x64xbf16>
      %41 = arith.truncf %39 : vector<8x64xf32> to vector<8x64xbf16>
      %cst_28 = arith.constant dense<0.000000e+00> : vector<8x64xf32>
      %42 = tpu.matmul %41, %40, %cst_28 {dimension_numbers = #tpu.dot_dimension_numbers<[1], [0], [0], [1], [0, 0, 1, 1], [], []>} : vector<8x64xbf16>, vector<64x64xbf16>, vector<8x64xf32> -> vector<8x64xf32>
      %c0_29 = arith.constant 0 : index
      %c384 = arith.constant 384 : index
      %43 = vector.load %arg11[%c0_29, %c384] : memref<1x768xf32, #tpu.memory_space<vmem>>, vector<1x64xf32>
      %44 = vector.broadcast %43 : vector<1x64xf32> to vector<8x64xf32>
      %45 = arith.addf %42, %44 : vector<8x64xf32>
      %c0_30 = arith.constant 0 : index
      %c0_31 = arith.constant 0 : index
      %46 = vector.load %arg9[%c0_30, %c0_31] : memref<128x64xbf16, #tpu.memory_space<vmem>>, vector<128x64xbf16>
      %47 = vector.extract_strided_slice %46 {offsets = [0, 0], sizes = [64, 64], strides = [1, 1]} : vector<128x64xbf16> to vector<64x64xbf16>
      %48 = arith.truncf %45 : vector<8x64xf32> to vector<8x64xbf16>
      %cst_32 = arith.constant dense<0.000000e+00> : vector<8x64xf32>
      %49 = tpu.matmul %48, %47, %cst_32 {dimension_numbers = #tpu.dot_dimension_numbers<[1], [0], [0], [1], [0, 0, 1, 1], [], []>} : vector<8x64xbf16>, vector<64x64xbf16>, vector<8x64xf32> -> vector<8x64xf32>
      %50 = vector.extract_strided_slice %46 {offsets = [64, 0], sizes = [64, 64], strides = [1, 1]} : vector<128x64xbf16> to vector<64x64xbf16>
      %51 = arith.truncf %33 : vector<8x64xf32> to vector<8x64xbf16>
      %cst_33 = arith.constant dense<0.000000e+00> : vector<8x64xf32>
      %52 = tpu.matmul %51, %50, %cst_33 {dimension_numbers = #tpu.dot_dimension_numbers<[1], [0], [0], [1], [0, 0, 1, 1], [], []>} : vector<8x64xbf16>, vector<64x64xbf16>, vector<8x64xf32> -> vector<8x64xf32>
      %53 = arith.addf %49, %52 : vector<8x64xf32>
      %c0_34 = arith.constant 0 : index
      %c512 = arith.constant 512 : index
      %54 = vector.load %arg11[%c0_34, %c512] : memref<1x768xf32, #tpu.memory_space<vmem>>, vector<1x64xf32>
      %55 = vector.broadcast %54 : vector<1x64xf32> to vector<8x64xf32>
      %56 = arith.addf %53, %55 : vector<8x64xf32>
      %cst_35 = arith.constant 0.000000e+00 : f32
      %57 = vector.broadcast %cst_35 : f32 to vector<8x64xf32>
      %58 = arith.maximumf %56, %57 : vector<8x64xf32>
      %c0_36 = arith.constant 0 : index
      %c0_37 = arith.constant 0 : index
      %59 = vector.load %arg10[%c0_36, %c0_37] : memref<64x128xbf16, #tpu.memory_space<vmem>>, vector<64x128xbf16>
      %60 = arith.truncf %58 : vector<8x64xf32> to vector<8x64xbf16>
      %cst_38 = arith.constant dense<0.000000e+00> : vector<8x128xf32>
      %61 = tpu.matmul %60, %59, %cst_38 {dimension_numbers = #tpu.dot_dimension_numbers<[1], [0], [0], [1], [0, 0, 1, 1], [], []>} : vector<8x64xbf16>, vector<64x128xbf16>, vector<8x128xf32> -> vector<8x128xf32>
      %c0_39 = arith.constant 0 : index
      %c640 = arith.constant 640 : index
      %62 = vector.load %arg11[%c0_39, %c640] : memref<1x768xf32, #tpu.memory_space<vmem>>, vector<1x128xf32>
      %63 = vector.broadcast %62 : vector<1x128xf32> to vector<8x128xf32>
      %64 = arith.addf %61, %63 : vector<8x128xf32>
      %65 = arith.negf %64 : vector<8x128xf32>
      %66 = math.exp %65 : vector<8x128xf32>
      %cst_40 = arith.constant 1.000000e+00 : f32
      %67 = vector.broadcast %cst_40 : f32 to vector<8x128xf32>
      %68 = arith.addf %67, %66 : vector<8x128xf32>
      %69 = arith.divf %67, %68 : vector<8x128xf32>
      %c0_41 = arith.constant 0 : index
      %c0_42 = arith.constant 0 : index
      %70 = vector.load %arg12[%c0_41, %c0_42] : memref<8x128xf32, #tpu.memory_space<vmem>>, vector<8x128xf32>
      tpu.vector_store %arg12[%c0_41, %c0_42], %69 {strides = array<i32>} : memref<8x128xf32, #tpu.memory_space<vmem>>, vector<8x128xf32>,
    } else {
    }
    return
  }
  func.func @transform_0(%arg0: i32) -> (i32, i32) {
    %c0_i32 = arith.constant 0 : i32
    %c0_i32_0 = arith.constant 0 : i32
    %c0_i32_1 = arith.constant 0 : i32
    return %c0_i32, %c0_i32_0 : i32, i32
  }
  func.func @transform_1(%arg0: i32) -> (i32, i32) {
    %c0_i32 = arith.constant 0 : i32
    %c0_i32_0 = arith.constant 0 : i32
    %c0_i32_1 = arith.constant 0 : i32
    return %c0_i32, %c0_i32_0 : i32, i32
  }
  func.func @transform_2(%arg0: i32) -> (i32, i32) {
    %c0_i32 = arith.constant 0 : i32
    %c0_i32_0 = arith.constant 0 : i32
    return %c0_i32, %arg0 : i32, i32
  }
  func.func @transform_3(%arg0: i32) -> (i32, i32) {
    %c0_i32 = arith.constant 0 : i32
    %c0_i32_0 = arith.constant 0 : i32
    return %c0_i32, %arg0 : i32, i32
  }
  func.func @transform_4(%arg0: i32) -> (i32, i32) {
    %c0_i32 = arith.constant 0 : i32
    %c0_i32_0 = arith.constant 0 : i32
    %c0_i32_1 = arith.constant 0 : i32
    return %c0_i32, %c0_i32_0 : i32, i32
  }
  func.func @transform_5(%arg0: i32) -> (i32, i32) {
    %c0_i32 = arith.constant 0 : i32
    %c0_i32_0 = arith.constant 0 : i32
    %c0_i32_1 = arith.constant 0 : i32
    return %c0_i32, %c0_i32_0 : i32, i32
  }
  func.func @transform_6(%arg0: i32) -> (i32, i32) {
    %c0_i32 = arith.constant 0 : i32
    %c0_i32_0 = arith.constant 0 : i32
    %c0_i32_1 = arith.constant 0 : i32
    return %c0_i32, %c0_i32_0 : i32, i32
  }
  func.func @transform_7(%arg0: i32) -> (i32, i32) {
    %c0_i32 = arith.constant 0 : i32
    %c0_i32_0 = arith.constant 0 : i32
    %c0_i32_1 = arith.constant 0 : i32
    return %c0_i32, %c0_i32_0 : i32, i32
  }
  func.func @transform_8(%arg0: i32) -> (i32, i32) {
    %c0_i32 = arith.constant 0 : i32
    %c0_i32_0 = arith.constant 0 : i32
    %c0_i32_1 = arith.constant 0 : i32
    return %c0_i32, %c0_i32_0 : i32, i32
  }
  func.func @transform_9(%arg0: i32) -> (i32, i32) {
    %c0_i32 = arith.constant 0 : i32
    %c0_i32_0 = arith.constant 0 : i32
    %c0_i32_1 = arith.constant 0 : i32
    return %c0_i32, %c0_i32_0 : i32, i32
  }
  func.func @transform_10(%arg0: i32) -> (i32, i32) {
    %c0_i32 = arith.constant 0 : i32
    %c0_i32_0 = arith.constant 0 : i32
    %c0_i32_1 = arith.constant 0 : i32
    return %c0_i32, %c0_i32_0 : i32, i32
  }
  func.func @transform_11(%arg0: i32) -> (i32, i32) {
    %c0_i32 = arith.constant 0 : i32
    %c0_i32_0 = arith.constant 0 : i32
    %c0_i32_1 = arith.constant 0 : i32
    return %c0_i32, %c0_i32_0 : i32, i32
  }
}

</mosaic_0001>

<llo_original>
// kernel: tpu_custom_call.1
$region0: #{tpu_custom_call.1}
  #allocation0 [shape = 'u32[]', space=smem, size = 0x4, offset = 0x4, fixed_abs, tag = 'smem constant byte address 0x4 - core index']
  #allocation1 [shape = 'u32[144,128]{1,0:T(1,128)}', space=vmem, size = 0x12000, scoped, tag = 'internal scratch']
  #allocation2 [shape = 'f32[8,256]{1,0:T(8,128)}', space=vmem, size = 0x2000, scoped, tag = 'scratch operand']
  %s0 = inlined_call_operand.hbm [shape: bf16[8,16], index: 0, kind: input, shape index: {}]
  %s1 = inlined_call_operand.vmem [shape: bf16[8,1152], index: 1, kind: input, shape index: {}]
  %s2 = inlined_call_operand.hbm [shape: s8[1152,256], index: 2, kind: input, shape index: {}]
  %s3 = inlined_call_operand.hbm [shape: f32[2,256], index: 3, kind: input, shape index: {}]
  %s4 = inlined_call_operand.vmem [shape: bf16[256,128], index: 4, kind: input, shape index: {}]
  %s5 = inlined_call_operand.vmem [shape: bf16[128,64], index: 5, kind: input, shape index: {}]
  %s6 = inlined_call_operand.vmem [shape: bf16[16,64], index: 6, kind: input, shape index: {}]
  %s7 = inlined_call_operand.hbm [shape: bf16[64,64], index: 7, kind: input, shape index: {}]
  %s8 = inlined_call_operand.vmem [shape: bf16[128,64], index: 8, kind: input, shape index: {}]
  %s9 = inlined_call_operand.hbm [shape: bf16[64,128], index: 9, kind: input, shape index: {}]
  %s10 = inlined_call_operand.vmem [shape: f32[1,768], index: 10, kind: input, shape index: {}]
  %s11 = inlined_call_operand.hbm [shape: f32[8,128], index: 11, kind: output, shape index: {}]
  %s12 = sld [smem:[#allocation0]]
  $region101: #{tpu_custom_call.1} parent=0
    _
  %s14 = ssub.s32 1, %s12
  %s15 = scalar_select 0, %s14, %s12
  $region1: #{tpu_custom_call.1} parent=0
    #allocation3 [shape = 'u8[2048]{0}', space=vmem, size = 0x800, scoped, tag = 'input window, operand 0, single buffered']
    #allocation4 [shape = 's32[2]{0}', space=sflag, size = 0x8, scoped, tag = 'scoped memory for tpu_custom_call.1']
    #allocation5 [shape = 's32[2]{0}', space=sflag, size = 0x8, scoped, tag = 'scoped memory for tpu_custom_call.1']
    #allocation6 [shape = 'u8[294912]{0}', space=vmem, size = 0x48000, scoped, tag = 'input window, operand 2']
    #allocation7 [shape = 's32[2]{0}', space=sflag, size = 0x8, scoped, tag = 'scoped memory for tpu_custom_call.1']
    #allocation8 [shape = 'u8[2048]{0}', space=vmem, size = 0x800, scoped, tag = 'input window, operand 3']
    #allocation9 [shape = 'u8[16384]{0}', space=vmem, size = 0x4000, scoped, tag = 'input window, operand 7, single buffered']
    #allocation10 [shape = 's32[1]{0}', space=sflag, size = 0x4, scoped, tag = 'scoped memory for tpu_custom_call.1']
    #allocation11 [shape = 'u8[16384]{0}', space=vmem, size = 0x4000, scoped, tag = 'input window, operand 9, single buffered']
    #allocation12 [shape = 'u8[4096]{0}', space=vmem, size = 0x1000, scoped, tag = 'output window, operand 0, single buffered']
    %16 = vsyncpa [#allocation4], 0
    %17 = vsyncpa [#allocation7], 0
    %s18 = scalar_lea.sflag [#allocation7], 1
    %19 = vsyncpa %s18, 0
    %20 = vsyncpa [#allocation10], 0
    %21 = vsyncpa [#allocation5], 0
    loop: start=0, step=1, limit=4
    $region2: #{tpu_custom_call.1} parent=1 // loop_pre_header
      _
    $region3: #{tpu_custom_call.1} parent=1 // loop_header
      %s23 = sphi 0, %s27
      %p24 = scmp.ge.s32.totalorder %s23, 4
      %s31 = sphi 0, %s31
      %s33 = sphi 0, %s31
      %s34 = sphi 0, %s33
      %s48 = sphi 0, %s34
      %s52 = sphi 0, %s52
      %s54 = sphi 0, %s52
      %s55 = sphi 0, %s54
      %s69 = sphi 0, %s55
      %s75 = sphi 0, %s77
      %s78 = sphi 0, %s75
      %s79 = sphi 0, %s78
      %s95 = sphi 0, %s79
      %s101 = sphi 0, %s103
      %s104 = sphi 0, %s101
      %s105 = sphi 0, %s104
      %s121 = sphi 0, %s105
      %s125 = sphi 0, %s125
      %s127 = sphi 0, %s125
      %s128 = sphi 0, %s127
      %s142 = sphi 0, %s128
      %s146 = sphi 0, %s146
      %s148 = sphi 0, %s146
      %s149 = sphi 0, %s148
      %s163 = sphi 0, %s149
      %s167 = sphi 0, %s167
      %s169 = sphi 0, %s167
      %s170 = sphi 0, %s169
      %s184 = sphi 0, %s170
      %s188 = sphi 0, %s188
      %s190 = sphi 0, %s188
      %s191 = sphi 0, %s190
      %s205 = sphi 0, %s191
      %s209 = sphi 0, %s209
      %s211 = sphi 0, %s209
      %s212 = sphi 0, %s211
      %s226 = sphi 0, %s212
      %s230 = sphi 0, %s230
      %s232 = sphi 0, %s230
      %s233 = sphi 0, %s232
      %s247 = sphi 0, %s233
      %s251 = sphi 0, %s251
      %s253 = sphi 0, %s251
      %s254 = sphi 0, %s253
      %s268 = sphi 0, %s254
      %s272 = sphi 0, %s272
      %s274 = sphi 0, %s272
      %s275 = sphi 0, %s274
      %s289 = sphi 0, %s275
    $region4: #{tpu_custom_call.1} parent=1 // loop_header_branch
      %26 = sbr.rel (%p24) target = $region8
    $region5: #{tpu_custom_call.1} parent=1 // loop_body
      %s28 = ssub.s32 %s23, 1
      %s29 = ssub.s32 %s23, 2
      %s30 = sadd.s32 %s23, 1
      %s32 = sadd.s32 %s31, 1
      %p35 = scmp.eq.s32.totalorder %s23, 1
      %p36 = scmp.ne.s32.totalorder %s31, %s33
      %p37 = scmp.eq.s32.totalorder %s23, 0
      %p38 = por %p36, %p37
      %p39 = scmp.ne.s32.totalorder %s31, %s33
      %p40 = scmp.eq.s32.totalorder %s28, 1
      %p41 = por %p39, %p40
      %p42 = scmp.ne.s32.totalorder %s33, %s34
      %p43 = scmp.eq.s32.totalorder %s28, 0
      %p44 = por %p42, %p43
      %p45 = scmp.ne.s32.totalorder %s33, %s34
      %p46 = scmp.eq.s32.totalorder %s29, 1
      %p47 = por %p45, %p46
      %p49 = scmp.ne.s32.totalorder %s34, %s48
      %p50 = scmp.eq.s32.totalorder %s29, 0
      %p51 = por %p49, %p50
      %s53 = sadd.s32 %s52, 1
      %p56 = scmp.eq.s32.totalorder %s23, 1
      %p57 = scmp.ne.s32.totalorder %s52, %s54
      %p58 = scmp.eq.s32.totalorder %s23, 0
      %p59 = por %p57, %p58
      %p60 = scmp.ne.s32.totalorder %s52, %s54
      %p61 = scmp.eq.s32.totalorder %s28, 1
      %p62 = por %p60, %p61
      %p63 = scmp.ne.s32.totalorder %s54, %s55
      %p64 = scmp.eq.s32.totalorder %s28, 0
      %p65 = por %p63, %p64
      %p66 = scmp.ne.s32.totalorder %s54, %s55
      %p67 = scmp.eq.s32.totalorder %s29, 1
      %p68 = por %p66, %p67
      %p70 = scmp.ne.s32.totalorder %s55, %s69
      %p71 = scmp.eq.s32.totalorder %s29, 0
      %p72 = por %p70, %p71
      %s73 = ssub.s32 %s23, %s30
      %p74 = scmp.eq.s32.totalorder %s73, 0
      %s76 = sadd.s32 %s75, 1
      %s77 = scalar_select %p74, %s75, %s76
      %p80 = pneg %p74
      %p81 = scmp.eq.s32.totalorder %s23, 1
      %p82 = por %p80, %p81
      %p83 = scmp.ne.s32.totalorder %s75, %s78
      %p84 = scmp.eq.s32.totalorder %s23, 0
      %p85 = por %p83, %p84
      %p86 = scmp.ne.s32.totalorder %s75, %s78
      %p87 = scmp.eq.s32.totalorder %s28, 1
      %p88 = por %p86, %p87
      %p89 = scmp.ne.s32.totalorder %s78, %s79
      %p90 = scmp.eq.s32.totalorder %s28, 0
      %p91 = por %p89, %p90
      %p92 = scmp.ne.s32.totalorder %s78, %s79
      %p93 = scmp.eq.s32.totalorder %s29, 1
      %p94 = por %p92, %p93
      %p96 = scmp.ne.s32.totalorder %s79, %s95
      %p97 = scmp.eq.s32.totalorder %s29, 0
      %p98 = por %p96, %p97
      %s99 = ssub.s32 %s23, %s30
      %p100 = scmp.eq.s32.totalorder %s99, 0
      %s102 = sadd.s32 %s101, 1
      %s103 = scalar_select %p100, %s101, %s102
      %p106 = pneg %p100
      %p107 = scmp.eq.s32.totalorder %s23, 1
      %p108 = por %p106, %p107
      %p109 = scmp.ne.s32.totalorder %s101, %s104
      %p110 = scmp.eq.s32.totalorder %s23, 0
      %p111 = por %p109, %p110
      %p112 = scmp.ne.s32.totalorder %s101, %s104
      %p113 = scmp.eq.s32.totalorder %s28, 1
      %p114 = por %p112, %p113
      %p115 = scmp.ne.s32.totalorder %s104, %s105
      %p116 = scmp.eq.s32.totalorder %s28, 0
      %p117 = por %p115, %p116
      %p118 = scmp.ne.s32.totalorder %s104, %s105
      %p119 = scmp.eq.s32.totalorder %s29, 1
      %p120 = por %p118, %p119
      %p122 = scmp.ne.s32.totalorder %s105, %s121
      %p123 = scmp.eq.s32.totalorder %s29, 0
      %p124 = por %p122, %p123
      %s126 = sadd.s32 %s125, 1
      %p129 = scmp.eq.s32.totalorder %s23, 1
      %p130 = scmp.ne.s32.totalorder %s125, %s127
      %p131 = scmp.eq.s32.totalorder %s23, 0
      %p132 = por %p130, %p131
      %p133 = scmp.ne.s32.totalorder %s125, %s127
      %p134 = scmp.eq.s32.totalorder %s28, 1
      %p135 = por %p133, %p134
      %p136 = scmp.ne.s32.totalorder %s127, %s128
      %p137 = scmp.eq.s32.totalorder %s28, 0
      %p138 = por %p136, %p137
      %p139 = scmp.ne.s32.totalorder %s127, %s128
      %p140 = scmp.eq.s32.totalorder %s29, 1
      %p141 = por %p139, %p140
      %p143 = scmp.ne.s32.totalorder %s128, %s142
      %p144 = scmp.eq.s32.totalorder %s29, 0
      %p145 = por %p143, %p144
      %s147 = sadd.s32 %s146, 1
      %p150 = scmp.eq.s32.totalorder %s23, 1
      %p151 = scmp.ne.s32.totalorder %s146, %s148
      %p152 = scmp.eq.s32.totalorder %s23, 0
      %p153 = por %p151, %p152
      %p154 = scmp.ne.s32.totalorder %s146, %s148
      %p155 = scmp.eq.s32.totalorder %s28, 1
      %p156 = por %p154, %p155
      %p157 = scmp.ne.s32.totalorder %s148, %s149
      %p158 = scmp.eq.s32.totalorder %s28, 0
      %p159 = por %p157, %p158
      %p160 = scmp.ne.s32.totalorder %s148, %s149
      %p161 = scmp.eq.s32.totalorder %s29, 1
      %p162 = por %p160, %p161
      %p164 = scmp.ne.s32.totalorder %s149, %s163
      %p165 = scmp.eq.s32.totalorder %s29, 0
      %p166 = por %p164, %p165
      %s168 = sadd.s32 %s167, 1
      %p171 = scmp.eq.s32.totalorder %s23, 1
      %p172 = scmp.ne.s32.totalorder %s167, %s169
      %p173 = scmp.eq.s32.totalorder %s23, 0
      %p174 = por %p172, %p173
      %p175 = scmp.ne.s32.totalorder %s167, %s169
      %p176 = scmp.eq.s32.totalorder %s28, 1
      %p177 = por %p175, %p176
      %p178 = scmp.ne.s32.totalorder %s169, %s170
      %p179 = scmp.eq.s32.totalorder %s28, 0
      %p180 = por %p178, %p179
      %p181 = scmp.ne.s32.totalorder %s169, %s170
      %p182 = scmp.eq.s32.totalorder %s29, 1
      %p183 = por %p181, %p182
      %p185 = scmp.ne.s32.totalorder %s170, %s184
      %p186 = scmp.eq.s32.totalorder %s29, 0
      %p187 = por %p185, %p186
      %s189 = sadd.s32 %s188, 1
      %p192 = scmp.eq.s32.totalorder %s23, 1
      %p193 = scmp.ne.s32.totalorder %s188, %s190
      %p194 = scmp.eq.s32.totalorder %s23, 0
      %p195 = por %p193, %p194
      %p196 = scmp.ne.s32.totalorder %s188, %s190
      %p197 = scmp.eq.s32.totalorder %s28, 1
      %p198 = por %p196, %p197
      %p199 = scmp.ne.s32.totalorder %s190, %s191
      %p200 = scmp.eq.s32.totalorder %s28, 0
      %p201 = por %p199, %p200
      %p202 = scmp.ne.s32.totalorder %s190, %s191
      %p203 = scmp.eq.s32.totalorder %s29, 1
      %p204 = por %p202, %p203
      %p206 = scmp.ne.s32.totalorder %s191, %s205
      %p207 = scmp.eq.s32.totalorder %s29, 0
      %p208 = por %p206, %p207
      %s210 = sadd.s32 %s209, 1
      %p213 = scmp.eq.s32.totalorder %s23, 1
      %p214 = scmp.ne.s32.totalorder %s209, %s211
      %p215 = scmp.eq.s32.totalorder %s23, 0
      %p216 = por %p214, %p215
      %p217 = scmp.ne.s32.totalorder %s209, %s211
      %p218 = scmp.eq.s32.totalorder %s28, 1
      %p219 = por %p217, %p218
      %p220 = scmp.ne.s32.totalorder %s211, %s212
      %p221 = scmp.eq.s32.totalorder %s28, 0
      %p222 = por %p220, %p221
      %p223 = scmp.ne.s32.totalorder %s211, %s212
      %p224 = scmp.eq.s32.totalorder %s29, 1
      %p225 = por %p223, %p224
      %p227 = scmp.ne.s32.totalorder %s212, %s226
      %p228 = scmp.eq.s32.totalorder %s29, 0
      %p229 = por %p227, %p228
      %s231 = sadd.s32 %s230, 1
      %p234 = scmp.eq.s32.totalorder %s23, 1
      %p235 = scmp.ne.s32.totalorder %s230, %s232
      %p236 = scmp.eq.s32.totalorder %s23, 0
      %p237 = por %p235, %p236
      %p238 = scmp.ne.s32.totalorder %s230, %s232
      %p239 = scmp.eq.s32.totalorder %s28, 1
      %p240 = por %p238, %p239
      %p241 = scmp.ne.s32.totalorder %s232, %s233
      %p242 = scmp.eq.s32.totalorder %s28, 0
      %p243 = por %p241, %p242
      %p244 = scmp.ne.s32.totalorder %s232, %s233
      %p245 = scmp.eq.s32.totalorder %s29, 1
      %p246 = por %p244, %p245
      %p248 = scmp.ne.s32.totalorder %s233, %s247
      %p249 = scmp.eq.s32.totalorder %s29, 0
      %p250 = por %p248, %p249
      %s252 = sadd.s32 %s251, 1
      %p255 = scmp.eq.s32.totalorder %s23, 1
      %p256 = scmp.ne.s32.totalorder %s251, %s253
      %p257 = scmp.eq.s32.totalorder %s23, 0
      %p258 = por %p256, %p257
      %p259 = scmp.ne.s32.totalorder %s251, %s253
      %p260 = scmp.eq.s32.totalorder %s28, 1
      %p261 = por %p259, %p260
      %p262 = scmp.ne.s32.totalorder %s253, %s254
      %p263 = scmp.eq.s32.totalorder %s28, 0
      %p264 = por %p262, %p263
      %p265 = scmp.ne.s32.totalorder %s253, %s254
      %p266 = scmp.eq.s32.totalorder %s29, 1
      %p267 = por %p265, %p266
      %p269 = scmp.ne.s32.totalorder %s254, %s268
      %p270 = scmp.eq.s32.totalorder %s29, 0
      %p271 = por %p269, %p270
      %s273 = sadd.s32 %s272, 1
      %p276 = scmp.eq.s32.totalorder %s23, 1
      %p277 = scmp.ne.s32.totalorder %s272, %s274
      %p278 = scmp.eq.s32.totalorder %s23, 0
      %p279 = por %p277, %p278
      %p280 = scmp.ne.s32.totalorder %s272, %s274
      %p281 = scmp.eq.s32.totalorder %s28, 1
      %p282 = por %p280, %p281
      %p283 = scmp.ne.s32.totalorder %s274, %s275
      %p284 = scmp.eq.s32.totalorder %s28, 0
      %p285 = por %p283, %p284
      %p286 = scmp.ne.s32.totalorder %s274, %s275
      %p287 = scmp.eq.s32.totalorder %s29, 1
      %p288 = por %p286, %p287
      %p290 = scmp.ne.s32.totalorder %s275, %s289
      %p291 = scmp.eq.s32.totalorder %s29, 0
      %p292 = por %p290, %p291
      %p293 = scmp.le.s32.totalorder 1, %s23
      %p294 = scmp.lt.s32.totalorder %s23, 3
      %p295 = pnand %p293, %p294
      %p296 = pneg %p295
      // Predicated region
      $region9: #{tpu_custom_call.1} parent=5 // pred_check
        _
      $region10: #{tpu_custom_call.1} parent=5 // pred_check_branch
        %298 = sbr.rel (%p295) target = $region12
      $region11: #{tpu_custom_call.1} parent=5 // pred_region
        %s299 = ssub.s32 %s23, 1
        // Predicated region
        $region13: #{tpu_custom_call.1} parent=11 // pred_check
          %p300 = pneg %p44
        $region14: #{tpu_custom_call.1} parent=11 // pred_check_branch
          %302 = sbr.rel (%p300) target = $region16
        $region15: #{tpu_custom_call.1} parent=11 // pred_region
          %s304 = ssub.s32 64, 64
          %305 = vsyncadd [#allocation4], %s304
          %s307 = sshll.u32 [#allocation3], 4
          %s308 = int_to_ptr.vmem [resolvable:$true] %s307
          %310 = dma.hbm_to_vmem [thread:$0]  %s0, 64, %s308, [#allocation4]
        $region16: #{tpu_custom_call.1} parent=11 // pred_fallthru
          _
        // Predicated region
        $region17: #{tpu_custom_call.1} parent=11 // pred_check
          %p311 = pneg %p65
        $region18: #{tpu_custom_call.1} parent=11 // pred_check_branch
          %313 = sbr.rel (%p311) target = $region20
        $region19: #{tpu_custom_call.1} parent=11 // pred_region
          _
        $region20: #{tpu_custom_call.1} parent=11 // pred_fallthru
          _
        // Predicated region
        $region21: #{tpu_custom_call.1} parent=11 // pred_check
          %p314 = pneg %p138
        $region22: #{tpu_custom_call.1} parent=11 // pred_check_branch
          %316 = sbr.rel (%p314) target = $region24
        $region23: #{tpu_custom_call.1} parent=11 // pred_region
          _
        $region24: #{tpu_custom_call.1} parent=11 // pred_fallthru
          _
        // Predicated region
        $region25: #{tpu_custom_call.1} parent=11 // pred_check
          %p317 = pneg %p159
        $region26: #{tpu_custom_call.1} parent=11 // pred_check_branch
          %319 = sbr.rel (%p317) target = $region28
        $region27: #{tpu_custom_call.1} parent=11 // pred_region
          _
        $region28: #{tpu_custom_call.1} parent=11 // pred_fallthru
          _
        // Predicated region
        $region29: #{tpu_custom_call.1} parent=11 // pred_check
          %p320 = pneg %p180
        $region30: #{tpu_custom_call.1} parent=11 // pred_check_branch
          %322 = sbr.rel (%p320) target = $region32
        $region31: #{tpu_custom_call.1} parent=11 // pred_region
          _
        $region32: #{tpu_custom_call.1} parent=11 // pred_fallthru
          _
        // Predicated region
        $region33: #{tpu_custom_call.1} parent=11 // pred_check
          %p323 = pneg %p201
        $region34: #{tpu_custom_call.1} parent=11 // pred_check_branch
          %325 = sbr.rel (%p323) target = $region36
        $region35: #{tpu_custom_call.1} parent=11 // pred_region
          %s327 = ssub.s32 512, 512
          %328 = vsyncadd [#allocation10], %s327
          %s329 = sshll.u32 [#allocation9], 4
          %s330 = int_to_ptr.vmem [resolvable:$true] %s329
          %335 = dma.hbm_to_vmem [thread:$0]  %s7, 512, %s330, [#allocation10], 64, 64, 4
        $region36: #{tpu_custom_call.1} parent=11 // pred_fallthru
          _
        // Predicated region
        $region37: #{tpu_custom_call.1} parent=11 // pred_check
          %p336 = pneg %p222
        $region38: #{tpu_custom_call.1} parent=11 // pred_check_branch
          %338 = sbr.rel (%p336) target = $region40
        $region39: #{tpu_custom_call.1} parent=11 // pred_region
          _
        $region40: #{tpu_custom_call.1} parent=11 // pred_fallthru
          _
        // Predicated region
        $region41: #{tpu_custom_call.1} parent=11 // pred_check
          %p339 = pneg %p243
        $region42: #{tpu_custom_call.1} parent=11 // pred_check_branch
          %341 = sbr.rel (%p339) target = $region44
        $region43: #{tpu_custom_call.1} parent=11 // pred_region
          %s343 = ssub.s32 512, 512
          %344 = vsyncadd [#allocation10], %s343
          %s345 = sshll.u32 [#allocation11], 4
          %s346 = int_to_ptr.vmem [resolvable:$true] %s345
          %351 = dma.hbm_to_vmem [thread:$0]  %s9, 512, %s346, [#allocation10], 64, 64, 4
        $region44: #{tpu_custom_call.1} parent=11 // pred_fallthru
          _
        // Predicated region
        $region45: #{tpu_custom_call.1} parent=11 // pred_check
          %p352 = pneg %p264
        $region46: #{tpu_custom_call.1} parent=11 // pred_check_branch
          %354 = sbr.rel (%p352) target = $region48
        $region47: #{tpu_custom_call.1} parent=11 // pred_region
          _
        $region48: #{tpu_custom_call.1} parent=11 // pred_fallthru
          _
      $region12: #{tpu_custom_call.1} parent=5 // pred_fallthru
        _
      %p355 = scmp.lt.s32.totalorder %s23, 2
      // Predicated region
      $region49: #{tpu_custom_call.1} parent=5 // pred_check
        %p356 = pneg %p355
      $region50: #{tpu_custom_call.1} parent=5 // pred_check_branch
        %358 = sbr.rel (%p356) target = $region52
      $region51: #{tpu_custom_call.1} parent=5 // pred_region
        // Predicated region
        $region53: #{tpu_custom_call.1} parent=51 // pred_check
          %p359 = pneg %p85
        $region54: #{tpu_custom_call.1} parent=51 // pred_check_branch
          %361 = sbr.rel (%p359) target = $region56
        $region55: #{tpu_custom_call.1} parent=51 // pred_region
          %s362 = sand.u32 %s23, 1
          %s363 = scalar_lea.sflag [#allocation7], %s362
          %s364 = sand.u32 %s75, 1
          %s365 = smul.addr %s364, 288
          %s366 = scalar_lea.vmem [#allocation6], %s365
          %s368 = ssub.s32 4608, 4608
          %369 = vsyncadd %s363, %s368
          %s370 = smul.addr %s23, 128
          %s371 = scalar_lea.hbm %s2, %s370
          %s372 = sshll.u32 %s366, 4
          %s373 = int_to_ptr.vmem [resolvable:$true] %s372
          %378 = dma.hbm_to_vmem [thread:$0]  %s371, 4608, %s373, %s363, 256, 128, 8
        $region56: #{tpu_custom_call.1} parent=51 // pred_fallthru
          _
        // Predicated region
        $region57: #{tpu_custom_call.1} parent=51 // pred_check
          %p379 = pneg %p111
        $region58: #{tpu_custom_call.1} parent=51 // pred_check_branch
          %381 = sbr.rel (%p379) target = $region60
        $region59: #{tpu_custom_call.1} parent=51 // pred_region
          %s382 = sand.u32 %s23, 1
          %s383 = scalar_lea.sflag [#allocation7], %s382
          %s384 = sand.u32 %s101, 1
          %s385 = smul.addr %s384, 2
          %s386 = scalar_lea.vmem [#allocation8], %s385
          %s388 = ssub.s32 32, 32
          %389 = vsyncadd %s383, %s388
          %s390 = smul.addr %s23, 32
          %s391 = scalar_lea.hbm %s3, %s390
          %s393 = sshll.u32 %s386, 4
          %s394 = int_to_ptr.vmem [resolvable:$true] %s393
          %396 = dma.hbm_to_vmem [thread:$0]  %s391, 32, %s394, %s383
        $region60: #{tpu_custom_call.1} parent=51 // pred_fallthru
          _
      $region52: #{tpu_custom_call.1} parent=5 // pred_fallthru
        _
      %p397 = scmp.le.s32.totalorder 1, %s23
      %p398 = scmp.lt.s32.totalorder %s23, 3
      %p399 = pnand %p397, %p398
      %p400 = pneg %p399
      // Predicated region
      $region61: #{tpu_custom_call.1} parent=5 // pred_check
        _
      $region62: #{tpu_custom_call.1} parent=5 // pred_check_branch
        %402 = sbr.rel (%p399) target = $region64
      $region63: #{tpu_custom_call.1} parent=5 // pred_region
        %s403 = ssub.s32 %s23, 1
        // Predicated region
        $region65: #{tpu_custom_call.1} parent=63 // pred_check
          %p404 = pneg %p44
        $region66: #{tpu_custom_call.1} parent=63 // pred_check_branch
          %406 = sbr.rel (%p404) target = $region68
        $region67: #{tpu_custom_call.1} parent=63 // pred_region
          %407 = dma.done [#allocation4], 64
        $region68: #{tpu_custom_call.1} parent=63 // pred_fallthru
          _
        %s408 = sand.u32 %s28, 1
        %s409 = scalar_lea.sflag [#allocation7], %s408
        %s410 = sand.u32 %s78, 1
        %s411 = smul.addr %s410, 288
        %s412 = scalar_lea.vmem [#allocation6], %s411
        // Predicated region
        $region69: #{tpu_custom_call.1} parent=63 // pred_check
          %p413 = pneg %p91
        $region70: #{tpu_custom_call.1} parent=63 // pred_check_branch
          %415 = sbr.rel (%p413) target = $region72
        $region71: #{tpu_custom_call.1} parent=63 // pred_region
          %416 = dma.done %s409, 4608
        $region72: #{tpu_custom_call.1} parent=63 // pred_fallthru
          _
        %s417 = sand.u32 %s28, 1
        %s418 = scalar_lea.sflag [#allocation7], %s417
        %s419 = sand.u32 %s104, 1
        %s420 = smul.addr %s419, 2
        %s421 = scalar_lea.vmem [#allocation8], %s420
        // Predicated region
        $region73: #{tpu_custom_call.1} parent=63 // pred_check
          %p422 = pneg %p117
        $region74: #{tpu_custom_call.1} parent=63 // pred_check_branch
          %424 = sbr.rel (%p422) target = $region76
        $region75: #{tpu_custom_call.1} parent=63 // pred_region
          %425 = dma.done %s418, 32
        $region76: #{tpu_custom_call.1} parent=63 // pred_fallthru
          _
        // Predicated region
        $region77: #{tpu_custom_call.1} parent=63 // pred_check
          %p426 = pneg %p201
        $region78: #{tpu_custom_call.1} parent=63 // pred_check_branch
          %428 = sbr.rel (%p426) target = $region80
        $region79: #{tpu_custom_call.1} parent=63 // pred_region
          %429 = dma.done [#allocation10], 512
        $region80: #{tpu_custom_call.1} parent=63 // pred_fallthru
          _
        // Predicated region
        $region81: #{tpu_custom_call.1} parent=63 // pred_check
          %p430 = pneg %p243
        $region82: #{tpu_custom_call.1} parent=63 // pred_check_branch
          %432 = sbr.rel (%p430) target = $region84
        $region83: #{tpu_custom_call.1} parent=63 // pred_region
          %433 = dma.done [#allocation10], 512
        $region84: #{tpu_custom_call.1} parent=63 // pred_fallthru
          _
        %p434 = pneg %p44
        %p435 = pneg %p41
        %p436 = pneg %p65
        %p437 = pneg %p62
        %s438 = sand.u32 %s28, 1
        %s439 = scalar_lea.sflag [#allocation7], %s438
        %s440 = sand.u32 %s78, 1
        %s441 = smul.addr %s440, 288
        %s442 = scalar_lea.vmem [#allocation6], %s441
        %p443 = pneg %p91
        %p444 = pneg %p88
        %s445 = sand.u32 %s28, 1
        %s446 = scalar_lea.sflag [#allocation7], %s445
        %s447 = sand.u32 %s104, 1
        %s448 = smul.addr %s447, 2
        %s449 = scalar_lea.vmem [#allocation8], %s448
        %p450 = pneg %p117
        %p451 = pneg %p114
        %p452 = pneg %p138
        %p453 = pneg %p135
        %p454 = pneg %p159
        %p455 = pneg %p156
        %p456 = pneg %p180
        %p457 = pneg %p177
        %p458 = pneg %p201
        %p459 = pneg %p198
        %p460 = pneg %p222
        %p461 = pneg %p219
        %p462 = pneg %p243
        %p463 = pneg %p240
        %p464 = pneg %p264
        %p465 = pneg %p261
        %p466 = pneg %p285
        %p467 = pneg %p282
        %v469 = vld [vmem:[%s412] sm:$0xff]
        %v470 = vld [vmem:[%s412 + $0x8] sm:$0xff]
        %v471 = vld [vmem:[%s412 + $0x10] sm:$0xff]
        %v472 = vld [vmem:[%s412 + $0x18] sm:$0xff]
        %v473 = vld [vmem:[%s412 + $0x20] sm:$0xff]
        %v474 = vld [vmem:[%s412 + $0x28] sm:$0xff]
        %v475 = vld [vmem:[%s412 + $0x30] sm:$0xff]
        %v476 = vld [vmem:[%s412 + $0x38] sm:$0xff]
        %v477 = vld [vmem:[%s412 + $0x40] sm:$0xff]
        %v478 = vld [vmem:[%s412 + $0x48] sm:$0xff]
        %v479 = vld [vmem:[%s412 + $0x50] sm:$0xff]
        %v480 = vld [vmem:[%s412 + $0x58] sm:$0xff]
        %v481 = vld [vmem:[%s412 + $0x60] sm:$0xff]
        %v482 = vld [vmem:[%s412 + $0x68] sm:$0xff]
        %v483 = vld [vmem:[%s412 + $0x70] sm:$0xff]
        %v484 = vld [vmem:[%s412 + $0x78] sm:$0xff]
        %v485 = vld [vmem:[%s412 + $0x80] sm:$0xff]
        %v486 = vld [vmem:[%s412 + $0x88] sm:$0xff]
        %v487 = vld [vmem:[%s412 + $0x90] sm:$0xff]
        %v488 = vld [vmem:[%s412 + $0x98] sm:$0xff]
        %v489 = vld [vmem:[%s412 + $0xa0] sm:$0xff]
        %v490 = vld [vmem:[%s412 + $0xa8] sm:$0xff]
        %v491 = vld [vmem:[%s412 + $0xb0] sm:$0xff]
        %v492 = vld [vmem:[%s412 + $0xb8] sm:$0xff]
        %v493 = vld [vmem:[%s412 + $0xc0] sm:$0xff]
        %v494 = vld [vmem:[%s412 + $0xc8] sm:$0xff]
        %v495 = vld [vmem:[%s412 + $0xd0] sm:$0xff]
        %v496 = vld [vmem:[%s412 + $0xd8] sm:$0xff]
        %v497 = vld [vmem:[%s412 + $0xe0] sm:$0xff]
        %v498 = vld [vmem:[%s412 + $0xe8] sm:$0xff]
        %v499 = vld [vmem:[%s412 + $0xf0] sm:$0xff]
        %v500 = vld [vmem:[%s412 + $0xf8] sm:$0xff]
        %v501 = vld [vmem:[%s412 + $0x100] sm:$0xff]
        %v502 = vld [vmem:[%s412 + $0x108] sm:$0xff]
        %v503 = vld [vmem:[%s412 + $0x110] sm:$0xff]
        %v504 = vld [vmem:[%s412 + $0x118] sm:$0xff]
        %v505 = vunpack.c.l.s8.bf16 %v469
        %v506 = vunpack.c.h.s8.bf16 %v469
        %v507 = vunpack.c.l.s8.bf16 %v470
        %v508 = vunpack.c.h.s8.bf16 %v470
        %v509 = vunpack.c.l.s8.bf16 %v471
        %v510 = vunpack.c.h.s8.bf16 %v471
        %v511 = vunpack.c.l.s8.bf16 %v472
        %v512 = vunpack.c.h.s8.bf16 %v472
        %v513 = vunpack.c.l.s8.bf16 %v473
        %v514 = vunpack.c.h.s8.bf16 %v473
        %v515 = vunpack.c.l.s8.bf16 %v474
        %v516 = vunpack.c.h.s8.bf16 %v474
        %v517 = vunpack.c.l.s8.bf16 %v475
        %v518 = vunpack.c.h.s8.bf16 %v475
        %v519 = vunpack.c.l.s8.bf16 %v476
        %v520 = vunpack.c.h.s8.bf16 %v476
        %v521 = vunpack.c.l.s8.bf16 %v477
        %v522 = vunpack.c.h.s8.bf16 %v477
        %v523 = vunpack.c.l.s8.bf16 %v478
        %v524 = vunpack.c.h.s8.bf16 %v478
        %v525 = vunpack.c.l.s8.bf16 %v479
        %v526 = vunpack.c.h.s8.bf16 %v479
        %v527 = vunpack.c.l.s8.bf16 %v480
        %v528 = vunpack.c.h.s8.bf16 %v480
        %v529 = vunpack.c.l.s8.bf16 %v481
        %v530 = vunpack.c.h.s8.bf16 %v481
        %v531 = vunpack.c.l.s8.bf16 %v482
        %v532 = vunpack.c.h.s8.bf16 %v482
        %v533 = vunpack.c.l.s8.bf16 %v483
        %v534 = vunpack.c.h.s8.bf16 %v483
        %v535 = vunpack.c.l.s8.bf16 %v484
        %v536 = vunpack.c.h.s8.bf16 %v484
        %v537 = vunpack.c.l.s8.bf16 %v485
        %v538 = vunpack.c.h.s8.bf16 %v485
        %v539 = vunpack.c.l.s8.bf16 %v486
        %v540 = vunpack.c.h.s8.bf16 %v486
        %v541 = vunpack.c.l.s8.bf16 %v487
        %v542 = vunpack.c.h.s8.bf16 %v487
        %v543 = vunpack.c.l.s8.bf16 %v488
        %v544 = vunpack.c.h.s8.bf16 %v488
        %v545 = vunpack.c.l.s8.bf16 %v489
        %v546 = vunpack.c.h.s8.bf16 %v489
        %v547 = vunpack.c.l.s8.bf16 %v490
        %v548 = vunpack.c.h.s8.bf16 %v490
        %v549 = vunpack.c.l.s8.bf16 %v491
        %v550 = vunpack.c.h.s8.bf16 %v491
        %v551 = vunpack.c.l.s8.bf16 %v492
        %v552 = vunpack.c.h.s8.bf16 %v492
        %v553 = vunpack.c.l.s8.bf16 %v493
        %v554 = vunpack.c.h.s8.bf16 %v493
        %v555 = vunpack.c.l.s8.bf16 %v494
        %v556 = vunpack.c.h.s8.bf16 %v494
        %v557 = vunpack.c.l.s8.bf16 %v495
        %v558 = vunpack.c.h.s8.bf16 %v495
        %v559 = vunpack.c.l.s8.bf16 %v496
        %v560 = vunpack.c.h.s8.bf16 %v496
        %v561 = vunpack.c.l.s8.bf16 %v497
        %v562 = vunpack.c.h.s8.bf16 %v497
        %v563 = vunpack.c.l.s8.bf16 %v498
        %v564 = vunpack.c.h.s8.bf16 %v498
        %v565 = vunpack.c.l.s8.bf16 %v499
        %v566 = vunpack.c.h.s8.bf16 %v499
        %v567 = vunpack.c.l.s8.bf16 %v500
        %v568 = vunpack.c.h.s8.bf16 %v500
        %v569 = vunpack.c.l.s8.bf16 %v501
        %v570 = vunpack.c.h.s8.bf16 %v501
        %v571 = vunpack.c.l.s8.bf16 %v502
        %v572 = vunpack.c.h.s8.bf16 %v502
        %v573 = vunpack.c.l.s8.bf16 %v503
        %v574 = vunpack.c.h.s8.bf16 %v503
        %v575 = vunpack.c.l.s8.bf16 %v504
        %v576 = vunpack.c.h.s8.bf16 %v504
        %v577 = vld [vmem:[%s1] sm:$0xff]
        %v578 = vld [vmem:[%s1 + $0x8] sm:$0xff]
        %v579 = vld [vmem:[%s1 + $0x10] sm:$0xff]
        %v580 = vld [vmem:[%s1 + $0x18] sm:$0xff]
        %v581 = vld [vmem:[%s1 + $0x20] sm:$0xf]
        %v587 = vunpack.c.l.b16 %v577
        %v588 = vunpack.c.h.b16 %v577
        %v589 = vunpack.c.l.b16 %v578
        %v590 = vunpack.c.h.b16 %v578
        %v591 = vunpack.c.l.b16 %v579
        %v592 = vunpack.c.h.b16 %v579
        %v593 = vunpack.c.l.b16 %v580
        %v594 = vunpack.c.h.b16 %v580
        %v595 = vunpack.c.l.b16 %v581
        %v596 = vpack.c.b16 %v587, %v587
        %v597 = vpack.c.b16 %v588, %v588
        %v598 = vpack.c.b16 %v589, %v589
        %v599 = vpack.c.b16 %v590, %v590
        %v600 = vpack.c.b16 %v591, %v591
        %v601 = vpack.c.b16 %v592, %v592
        %v602 = vpack.c.b16 %v593, %v593
        %v603 = vpack.c.b16 %v594, %v594
        %v604 = vpack.c.b16 %v595, %v595
        %614 = vmatprep.subr.bf16.mxu0 0
        %615 = vmatpush1.bf16.msra.mxu0 %v505
        %616 = vmatprep.subr.bf16.mxu0 0
        %617 = vmatpush1.bf16.msra.mxu0 %v506
        %618 = vmatprep.subr.bf16.mxu0 0
        %619 = vmatpush1.bf16.msra.mxu0 %v507
        %620 = vmatprep.subr.bf16.mxu0 0
        %621 = vmatpush1.bf16.msra.mxu0 %v508
        %622 = vmatprep.subr.bf16.mxu0 0
        %623 = vmatpush1.bf16.msra.mxu0 %v509
        %624 = vmatprep.subr.bf16.mxu0 0
        %625 = vmatpush1.bf16.msra.mxu0 %v510
        %626 = vmatprep.subr.bf16.mxu0 0
        %627 = vmatpush1.bf16.msra.mxu0 %v511
        %628 = vmatprep.subr.bf16.mxu0 0
        %629 = vmatpush1.bf16.msra.mxu0 %v512
        %630 = vmatprep.subr.bf16.mxu0 0
        %631 = vmatpush1.bf16.msra.mxu0 %v513
        %632 = vmatprep.subr.bf16.mxu0 0
        %633 = vmatpush1.bf16.msra.mxu0 %v514
        %634 = vmatprep.subr.bf16.mxu0 0
        %635 = vmatpush1.bf16.msra.mxu0 %v515
        %636 = vmatprep.subr.bf16.mxu0 0
        %637 = vmatpush1.bf16.msra.mxu0 %v516
        %638 = vmatprep.subr.bf16.mxu0 0
        %639 = vmatpush1.bf16.msra.mxu0 %v517
        %640 = vmatprep.subr.bf16.mxu0 0
        %641 = vmatpush1.bf16.msra.mxu0 %v518
        %642 = vmatprep.subr.bf16.mxu0 0
        %643 = vmatpush1.bf16.msra.mxu0 %v519
        %644 = vmatprep.subr.bf16.mxu0 0
        %645 = vmatpush1.bf16.msra.mxu0 %v520
        %646 = vmatprep.mubr.bf16.mxu0 %v597
        %647 = vmatmul.mubr.bf16.gmra.mrb[0].mxu0 %v596
        %v648 = vpop.f32.mrb[0].mxu0
        %v649 = vadd.f32 0.0, %v648
        %v650 = vpop.f32.mrb[0].mxu0
        %v651 = vpop.f32.mrb[0].mxu0
        %v652 = vpop.f32.mrb[0].mxu0
        %653 = vdwg.mxu0
        %654 = vmatprep.subr.bf16.mxu0 0
        %655 = vmatpush1.bf16.msra.mxu0 %v521
        %656 = vmatprep.subr.bf16.mxu0 0
        %657 = vmatpush1.bf16.msra.mxu0 %v522
        %658 = vmatprep.subr.bf16.mxu0 0
        %659 = vmatpush1.bf16.msra.mxu0 %v523
        %660 = vmatprep.subr.bf16.mxu0 0
        %661 = vmatpush1.bf16.msra.mxu0 %v524
        %662 = vmatprep.subr.bf16.mxu0 0
        %663 = vmatpush1.bf16.msra.mxu0 %v525
        %664 = vmatprep.subr.bf16.mxu0 0
        %665 = vmatpush1.bf16.msra.mxu0 %v526
        %666 = vmatprep.subr.bf16.mxu0 0
        %667 = vmatpush1.bf16.msra.mxu0 %v527
        %668 = vmatprep.subr.bf16.mxu0 0
        %669 = vmatpush1.bf16.msra.mxu0 %v528
        %670 = vmatprep.subr.bf16.mxu0 0
        %671 = vmatpush1.bf16.msra.mxu0 %v529
        %672 = vmatprep.subr.bf16.mxu0 0
        %673 = vmatpush1.bf16.msra.mxu0 %v530
        %674 = vmatprep.subr.bf16.mxu0 0
        %675 = vmatpush1.bf16.msra.mxu0 %v531
        %676 = vmatprep.subr.bf16.mxu0 0
        %677 = vmatpush1.bf16.msra.mxu0 %v532
        %678 = vmatprep.subr.bf16.mxu0 0
        %679 = vmatpush1.bf16.msra.mxu0 %v533
        %680 = vmatprep.subr.bf16.mxu0 0
        %681 = vmatpush1.bf16.msra.mxu0 %v534
        %682 = vmatprep.subr.bf16.mxu0 0
        %683 = vmatpush1.bf16.msra.mxu0 %v535
        %684 = vmatprep.subr.bf16.mxu0 0
        %685 = vmatpush1.bf16.msra.mxu0 %v536
        %686 = vmatprep.mubr.bf16.mxu0 %v599
        %687 = vmatmul.mubr.bf16.gmra.mrb[0].mxu0 %v598
        %v688 = vpop.f32.mrb[0].mxu0
        %v689 = vadd.f32 %v649, %v688
        %v690 = vpop.f32.mrb[0].mxu0
        %v691 = vpop.f32.mrb[0].mxu0
        %v692 = vpop.f32.mrb[0].mxu0
        %693 = vdwg.mxu0
        %694 = vmatprep.subr.bf16.mxu0 0
        %695 = vmatpush1.bf16.msra.mxu0 %v537
        %696 = vmatprep.subr.bf16.mxu0 0
        %697 = vmatpush1.bf16.msra.mxu0 %v538
        %698 = vmatprep.subr.bf16.mxu0 0
        %699 = vmatpush1.bf16.msra.mxu0 %v539
        %700 = vmatprep.subr.bf16.mxu0 0
        %701 = vmatpush1.bf16.msra.mxu0 %v540
        %702 = vmatprep.subr.bf16.mxu0 0
        %703 = vmatpush1.bf16.msra.mxu0 %v541
        %704 = vmatprep.subr.bf16.mxu0 0
        %705 = vmatpush1.bf16.msra.mxu0 %v542
        %706 = vmatprep.subr.bf16.mxu0 0
        %707 = vmatpush1.bf16.msra.mxu0 %v543
        %708 = vmatprep.subr.bf16.mxu0 0
        %709 = vmatpush1.bf16.msra.mxu0 %v544
        %710 = vmatprep.subr.bf16.mxu0 0
        %711 = vmatpush1.bf16.msra.mxu0 %v545
        %712 = vmatprep.subr.bf16.mxu0 0
        %713 = vmatpush1.bf16.msra.mxu0 %v546
        %714 = vmatprep.subr.bf16.mxu0 0
        %715 = vmatpush1.bf16.msra.mxu0 %v547
        %716 = vmatprep.subr.bf16.mxu0 0
        %717 = vmatpush1.bf16.msra.mxu0 %v548
        %718 = vmatprep.subr.bf16.mxu0 0
        %719 = vmatpush1.bf16.msra.mxu0 %v549
        %720 = vmatprep.subr.bf16.mxu0 0
        %721 = vmatpush1.bf16.msra.mxu0 %v550
        %722 = vmatprep.subr.bf16.mxu0 0
        %723 = vmatpush1.bf16.msra.mxu0 %v551
        %724 = vmatprep.subr.bf16.mxu0 0
        %725 = vmatpush1.bf16.msra.mxu0 %v552
        %726 = vmatprep.mubr.bf16.mxu0 %v601
        %727 = vmatmul.mubr.bf16.gmra.mrb[0].mxu0 %v600
        %v728 = vpop.f32.mrb[0].mxu0
        %v729 = vadd.f32 %v689, %v728
        %v730 = vpop.f32.mrb[0].mxu0
        %v731 = vpop.f32.mrb[0].mxu0
        %v732 = vpop.f32.mrb[0].mxu0
        %733 = vdwg.mxu0
        %734 = vmatprep.subr.bf16.mxu0 0
        %735 = vmatpush1.bf16.msra.mxu0 %v553
        %736 = vmatprep.subr.bf16.mxu0 0
        %737 = vmatpush1.bf16.msra.mxu0 %v554
        %738 = vmatprep.subr.bf16.mxu0 0
        %739 = vmatpush1.bf16.msra.mxu0 %v555
        %740 = vmatprep.subr.bf16.mxu0 0
        %741 = vmatpush1.bf16.msra.mxu0 %v556
        %742 = vmatprep.subr.bf16.mxu0 0
        %743 = vmatpush1.bf16.msra.mxu0 %v557
        %744 = vmatprep.subr.bf16.mxu0 0
        %745 = vmatpush1.bf16.msra.mxu0 %v558
        %746 = vmatprep.subr.bf16.mxu0 0
        %747 = vmatpush1.bf16.msra.mxu0 %v559
        %748 = vmatprep.subr.bf16.mxu0 0
        %749 = vmatpush1.bf16.msra.mxu0 %v560
        %750 = vmatprep.subr.bf16.mxu0 0
        %751 = vmatpush1.bf16.msra.mxu0 %v561
        %752 = vmatprep.subr.bf16.mxu0 0
        %753 = vmatpush1.bf16.msra.mxu0 %v562
        %754 = vmatprep.subr.bf16.mxu0 0
        %755 = vmatpush1.bf16.msra.mxu0 %v563
        %756 = vmatprep.subr.bf16.mxu0 0
        %757 = vmatpush1.bf16.msra.mxu0 %v564
        %758 = vmatprep.subr.bf16.mxu0 0
        %759 = vmatpush1.bf16.msra.mxu0 %v565
        %760 = vmatprep.subr.bf16.mxu0 0
        %761 = vmatpush1.bf16.msra.mxu0 %v566
        %762 = vmatprep.subr.bf16.mxu0 0
        %763 = vmatpush1.bf16.msra.mxu0 %v567
        %764 = vmatprep.subr.bf16.mxu0 0
        %765 = vmatpush1.bf16.msra.mxu0 %v568
        %766 = vmatprep.mubr.bf16.mxu0 %v603
        %767 = vmatmul.mubr.bf16.gmra.mrb[0].mxu0 %v602
        %v768 = vpop.f32.mrb[0].mxu0
        %v769 = vadd.f32 %v729, %v768
        %v770 = vpop.f32.mrb[0].mxu0
        %v771 = vpop.f32.mrb[0].mxu0
        %v772 = vpop.f32.mrb[0].mxu0
        %773 = vdwg.mxu0
        %774 = vmatprep.subr.bf16.mxu0 0
        %775 = vmatpush1.bf16.msra.mxu0 %v569
        %776 = vmatprep.subr.bf16.mxu0 0
        %777 = vmatpush1.bf16.msra.mxu0 %v570
        %778 = vmatprep.subr.bf16.mxu0 0
        %779 = vmatpush1.bf16.msra.mxu0 %v571
        %780 = vmatprep.subr.bf16.mxu0 0
        %781 = vmatpush1.bf16.msra.mxu0 %v572
        %782 = vmatprep.subr.bf16.mxu0 0
        %783 = vmatpush1.bf16.msra.mxu0 %v573
        %784 = vmatprep.subr.bf16.mxu0 0
        %785 = vmatpush1.bf16.msra.mxu0 %v574
        %786 = vmatprep.subr.bf16.mxu0 0
        %787 = vmatpush1.bf16.msra.mxu0 %v575
        %788 = vmatprep.subr.bf16.mxu0 0
        %789 = vmatpush1.bf16.msra.mxu0 %v576
        %790 = vmatprep.subr.bf16.mxu0 0
        %791 = vmatpush1.bf16.msra.mxu0 0
        %792 = vmatprep.subr.bf16.mxu0 0
        %793 = vmatpush1.bf16.msra.mxu0 0
        %794 = vmatprep.subr.bf16.mxu0 0
        %795 = vmatpush1.bf16.msra.mxu0 0
        %796 = vmatprep.subr.bf16.mxu0 0
        %797 = vmatpush1.bf16.msra.mxu0 0
        %798 = vmatprep.subr.bf16.mxu0 0
        %799 = vmatpush1.bf16.msra.mxu0 0
        %800 = vmatprep.subr.bf16.mxu0 0
        %801 = vmatpush1.bf16.msra.mxu0 0
        %802 = vmatprep.subr.bf16.mxu0 0
        %803 = vmatpush1.bf16.msra.mxu0 0
        %804 = vmatprep.subr.bf16.mxu0 0
        %805 = vmatpush1.bf16.msra.mxu0 0
        %806 = vmatprep.mubr.bf16.mxu0 0
        %807 = vmatmul.mubr.bf16.gmra.mrb[0].mxu0 %v604
        %v808 = vpop.f32.mrb[0].mxu0
        %v809 = vadd.f32 %v769, %v808
        %v810 = vpop.f32.mrb[0].mxu0
        %v811 = vpop.f32.mrb[0].mxu0
        %v812 = vpop.f32.mrb[0].mxu0
        %813 = vdwg.mxu0
        %v814 = vld [vmem:[%s421] sm:$0x1]
        %v815 = vlaneseq
        %v816 = vshrl.u32 %v815, 7
        %v817 = vsub.s32 0, %v816
        %v818 = vrot.slane %v814, %v817
        %v819 = vmul.f32 %v809, %v818
        %v820 = vld [vmem:[%s421 + $0x1] sm:$0x1]
        %v821 = vlaneseq
        %v822 = vshrl.u32 %v821, 7
        %v823 = vsub.s32 0, %v822
        %v824 = vrot.slane %v820, %v823
        %v825 = vadd.f32 %v819, %v824
        %s826 = smul.u32 %s28, 128
        %v827 = vmax.f32 %v825, 0.0
        %s828 = sshra.s32 %s826, 7
        %s829 = sand.u32 %s826, 127
        %s830 = smul.addr %s828, 8
        %s831 = scalar_lea.vmem [#allocation2], %s830
        %832 = vst [vmem:[%s831] sm:$0xff] %v827
        %p833 = scmp.eq.s32.totalorder %s28, 1
        // Predicated region
        $region85: #{tpu_custom_call.1} parent=63 // pred_check
          %p834 = pneg %p833
        $region86: #{tpu_custom_call.1} parent=63 // pred_check_branch
          %836 = sbr.rel (%p834) target = $region88
        $region87: #{tpu_custom_call.1} parent=63 // pred_region
          %v837 = vld [vmem:[#allocation2] sm:$0xff]
          %v838 = vld [vmem:[#allocation2 + $0x8] sm:$0xff]
          %v839 = vld [vmem:[%s4] sm:$0xf]
          %v840 = vld [vmem:[%s4 + $0x4] sm:$0xf]
          %v841 = vld [vmem:[%s4 + $0x8] sm:$0xf]
          %v842 = vld [vmem:[%s4 + $0xc] sm:$0xf]
          %v843 = vld [vmem:[%s4 + $0x10] sm:$0xf]
          %v844 = vld [vmem:[%s4 + $0x14] sm:$0xf]
          %v845 = vld [vmem:[%s4 + $0x18] sm:$0xf]
          %v846 = vld [vmem:[%s4 + $0x1c] sm:$0xf]
          %v847 = vld [vmem:[%s4 + $0x20] sm:$0xf]
          %v848 = vld [vmem:[%s4 + $0x24] sm:$0xf]
          %v849 = vld [vmem:[%s4 + $0x28] sm:$0xf]
          %v850 = vld [vmem:[%s4 + $0x2c] sm:$0xf]
          %v851 = vld [vmem:[%s4 + $0x30] sm:$0xf]
          %v852 = vld [vmem:[%s4 + $0x34] sm:$0xf]
          %v853 = vld [vmem:[%s4 + $0x38] sm:$0xf]
          %v854 = vld [vmem:[%s4 + $0x3c] sm:$0xf]
          %v855 = vld [vmem:[%s4 + $0x40] sm:$0xf]
          %v856 = vld [vmem:[%s4 + $0x44] sm:$0xf]
          %v857 = vld [vmem:[%s4 + $0x48] sm:$0xf]
          %v858 = vld [vmem:[%s4 + $0x4c] sm:$0xf]
          %v859 = vld [vmem:[%s4 + $0x50] sm:$0xf]
          %v860 = vld [vmem:[%s4 + $0x54] sm:$0xf]
          %v861 = vld [vmem:[%s4 + $0x58] sm:$0xf]
          %v862 = vld [vmem:[%s4 + $0x5c] sm:$0xf]
          %v863 = vld [vmem:[%s4 + $0x60] sm:$0xf]
          %v864 = vld [vmem:[%s4 + $0x64] sm:$0xf]
          %v865 = vld [vmem:[%s4 + $0x68] sm:$0xf]
          %v866 = vld [vmem:[%s4 + $0x6c] sm:$0xf]
          %v867 = vld [vmem:[%s4 + $0x70] sm:$0xf]
          %v868 = vld [vmem:[%s4 + $0x74] sm:$0xf]
          %v869 = vld [vmem:[%s4 + $0x78] sm:$0xf]
          %v870 = vld [vmem:[%s4 + $0x7c] sm:$0xf]
          %v871 = vpack.c.bf16 %v837, %v837
          %v872 = vpack.c.bf16 %v838, %v838
          %v873 = vld [vmem:[%s10] sm:$0x1]
          %v875 = vlaneseq
          %v876 = vshrl.u32 %v875, 7
          %v877 = vsub.s32 0, %v876
          %v878 = vrot.slane %v873, %v877
          %v912 = vunpack.c.l.b16 %v839
          %v913 = vunpack.c.l.b16 %v840
          %v914 = vunpack.c.l.b16 %v841
          %v915 = vunpack.c.l.b16 %v842
          %v916 = vunpack.c.l.b16 %v843
          %v917 = vunpack.c.l.b16 %v844
          %v918 = vunpack.c.l.b16 %v845
          %v919 = vunpack.c.l.b16 %v846
          %v920 = vunpack.c.l.b16 %v847
          %v921 = vunpack.c.l.b16 %v848
          %v922 = vunpack.c.l.b16 %v849
          %v923 = vunpack.c.l.b16 %v850
          %v924 = vunpack.c.l.b16 %v851
          %v925 = vunpack.c.l.b16 %v852
          %v926 = vunpack.c.l.b16 %v853
          %v927 = vunpack.c.l.b16 %v854
          %v928 = vunpack.c.l.b16 %v855
          %v929 = vunpack.c.l.b16 %v856
          %v930 = vunpack.c.l.b16 %v857
          %v931 = vunpack.c.l.b16 %v858
          %v932 = vunpack.c.l.b16 %v859
          %v933 = vunpack.c.l.b16 %v860
          %v934 = vunpack.c.l.b16 %v861
          %v935 = vunpack.c.l.b16 %v862
          %v936 = vunpack.c.l.b16 %v863
          %v937 = vunpack.c.l.b16 %v864
          %v938 = vunpack.c.l.b16 %v865
          %v939 = vunpack.c.l.b16 %v866
          %v940 = vunpack.c.l.b16 %v867
          %v941 = vunpack.c.l.b16 %v868
          %v942 = vunpack.c.l.b16 %v869
          %v943 = vunpack.c.l.b16 %v870
          %v944 = vpack.c.b16 %v913, %v912
          %v945 = vpack.c.b16 %v915, %v914
          %v946 = vpack.c.b16 %v917, %v916
          %v947 = vpack.c.b16 %v919, %v918
          %v948 = vpack.c.b16 %v921, %v920
          %v949 = vpack.c.b16 %v923, %v922
          %v950 = vpack.c.b16 %v925, %v924
          %v951 = vpack.c.b16 %v927, %v926
          %v952 = vpack.c.b16 %v929, %v928
          %v953 = vpack.c.b16 %v931, %v930
          %v954 = vpack.c.b16 %v933, %v932
          %v955 = vpack.c.b16 %v935, %v934
          %v956 = vpack.c.b16 %v937, %v936
          %v957 = vpack.c.b16 %v939, %v938
          %v958 = vpack.c.b16 %v941, %v940
          %v959 = vpack.c.b16 %v943, %v942
          %976 = vmatprep.subr.bf16.mxu0 0
          %977 = vmatpush1.bf16.msra.mxu0 %v944
          %978 = vmatprep.subr.bf16.mxu0 0
          %979 = vmatpush1.bf16.msra.mxu0 %v945
          %980 = vmatprep.subr.bf16.mxu0 0
          %981 = vmatpush1.bf16.msra.mxu0 %v946
          %982 = vmatprep.subr.bf16.mxu0 0
          %983 = vmatpush1.bf16.msra.mxu0 %v947
          %984 = vmatprep.subr.bf16.mxu0 0
          %985 = vmatpush1.bf16.msra.mxu0 %v948
          %986 = vmatprep.subr.bf16.mxu0 0
          %987 = vmatpush1.bf16.msra.mxu0 %v949
          %988 = vmatprep.subr.bf16.mxu0 0
          %989 = vmatpush1.bf16.msra.mxu0 %v950
          %990 = vmatprep.subr.bf16.mxu0 0
          %991 = vmatpush1.bf16.msra.mxu0 %v951
          %992 = vmatprep.subr.bf16.mxu0 0
          %993 = vmatpush1.bf16.msra.mxu0 %v952
          %994 = vmatprep.subr.bf16.mxu0 0
          %995 = vmatpush1.bf16.msra.mxu0 %v953
          %996 = vmatprep.subr.bf16.mxu0 0
          %997 = vmatpush1.bf16.msra.mxu0 %v954
          %998 = vmatprep.subr.bf16.mxu0 0
          %999 = vmatpush1.bf16.msra.mxu0 %v955
          %1000 = vmatprep.subr.bf16.mxu0 0
          %1001 = vmatpush1.bf16.msra.mxu0 %v956
          %1002 = vmatprep.subr.bf16.mxu0 0
          %1003 = vmatpush1.bf16.msra.mxu0 %v957
          %1004 = vmatprep.subr.bf16.mxu0 0
          %1005 = vmatpush1.bf16.msra.mxu0 %v958
          %1006 = vmatprep.subr.bf16.mxu0 0
          %1007 = vmatpush1.bf16.msra.mxu0 %v959
          %1008 = vmatprep.mubr.bf16.mxu0 %v872
          %1009 = vmatmul.mubr.bf16.gmra.mrb[0].mxu0 %v871
          %v1010 = vpop.f32.mrb[0].mxu0
          %v1011 = vadd.f32 %v878, %v1010
          %v1012 = vpop.f32.mrb[0].mxu0
          %v1013 = vpop.f32.mrb[0].mxu0
          %v1014 = vpop.f32.mrb[0].mxu0
          %1015 = vdwg.mxu0
          %v1016 = vmax.f32 %v1011, 0.0
          %v1017 = vld [vmem:[%s5] sm:$0xf]
          %v1018 = vld [vmem:[%s5 + $0x4] sm:$0xf]
          %v1019 = vld [vmem:[%s5 + $0x8] sm:$0xf]
          %v1020 = vld [vmem:[%s5 + $0xc] sm:$0xf]
          %v1021 = vld [vmem:[%s5 + $0x10] sm:$0xf]
          %v1022 = vld [vmem:[%s5 + $0x14] sm:$0xf]
          %v1023 = vld [vmem:[%s5 + $0x18] sm:$0xf]
          %v1024 = vld [vmem:[%s5 + $0x1c] sm:$0xf]
          %v1025 = vld [vmem:[%s5 + $0x20] sm:$0xf]
          %v1026 = vld [vmem:[%s5 + $0x24] sm:$0xf]
          %v1027 = vld [vmem:[%s5 + $0x28] sm:$0xf]
          %v1028 = vld [vmem:[%s5 + $0x2c] sm:$0xf]
          %v1029 = vld [vmem:[%s5 + $0x30] sm:$0xf]
          %v1030 = vld [vmem:[%s5 + $0x34] sm:$0xf]
          %v1031 = vld [vmem:[%s5 + $0x38] sm:$0xf]
          %v1032 = vld [vmem:[%s5 + $0x3c] sm:$0xf]
          %v1033 = vpack.c.bf16 %v1016, %v1016
          %v1034 = vld [vmem:[%s10 + $0x1] sm:$0x1]
          %v1036 = vlaneseq
          %v1037 = vshrl.u32 %v1036, 7
          %v1038 = vsub.s32 0, %v1037
          %v1039 = vrot.slane %v1034, %v1038
          %v1057 = vunpack.c.l.b16 %v1017
          %v1058 = vunpack.c.l.b16 %v1018
          %v1059 = vunpack.c.l.b16 %v1019
          %v1060 = vunpack.c.l.b16 %v1020
          %v1061 = vunpack.c.l.b16 %v1021
          %v1062 = vunpack.c.l.b16 %v1022
          %v1063 = vunpack.c.l.b16 %v1023
          %v1064 = vunpack.c.l.b16 %v1024
          %v1065 = vunpack.c.l.b16 %v1025
          %v1066 = vunpack.c.l.b16 %v1026
          %v1067 = vunpack.c.l.b16 %v1027
          %v1068 = vunpack.c.l.b16 %v1028
          %v1069 = vunpack.c.l.b16 %v1029
          %v1070 = vunpack.c.l.b16 %v1030
          %v1071 = vunpack.c.l.b16 %v1031
          %v1072 = vunpack.c.l.b16 %v1032
          %v1073 = vpack.c.b16 %v1058, %v1057
          %v1074 = vpack.c.b16 %v1060, %v1059
          %v1075 = vpack.c.b16 %v1062, %v1061
          %v1076 = vpack.c.b16 %v1064, %v1063
          %v1077 = vpack.c.b16 %v1066, %v1065
          %v1078 = vpack.c.b16 %v1068, %v1067
          %v1079 = vpack.c.b16 %v1070, %v1069
          %v1080 = vpack.c.b16 %v1072, %v1071
          %1089 = vmatprep.subr.bf16.mxu0 0
          %1090 = vmatpush1.bf16.msra.mxu0 %v1073
          %1091 = vmatprep.subr.bf16.mxu0 0
          %1092 = vmatpush1.bf16.msra.mxu0 %v1074
          %1093 = vmatprep.subr.bf16.mxu0 0
          %1094 = vmatpush1.bf16.msra.mxu0 %v1075
          %1095 = vmatprep.subr.bf16.mxu0 0
          %1096 = vmatpush1.bf16.msra.mxu0 %v1076
          %1097 = vmatprep.subr.bf16.mxu0 0
          %1098 = vmatpush1.bf16.msra.mxu0 %v1077
          %1099 = vmatprep.subr.bf16.mxu0 0
          %1100 = vmatpush1.bf16.msra.mxu0 %v1078
          %1101 = vmatprep.subr.bf16.mxu0 0
          %1102 = vmatpush1.bf16.msra.mxu0 %v1079
          %1103 = vmatprep.subr.bf16.mxu0 0
          %1104 = vmatpush1.bf16.msra.mxu0 %v1080
          %1105 = vmatprep.subr.bf16.mxu0 0
          %1106 = vmatpush1.bf16.msra.mxu0 0
          %1107 = vmatprep.subr.bf16.mxu0 0
          %1108 = vmatpush1.bf16.msra.mxu0 0
          %1109 = vmatprep.subr.bf16.mxu0 0
          %1110 = vmatpush1.bf16.msra.mxu0 0
          %1111 = vmatprep.subr.bf16.mxu0 0
          %1112 = vmatpush1.bf16.msra.mxu0 0
          %1113 = vmatprep.subr.bf16.mxu0 0
          %1114 = vmatpush1.bf16.msra.mxu0 0
          %1115 = vmatprep.subr.bf16.mxu0 0
          %1116 = vmatpush1.bf16.msra.mxu0 0
          %1117 = vmatprep.subr.bf16.mxu0 0
          %1118 = vmatpush1.bf16.msra.mxu0 0
          %1119 = vmatprep.subr.bf16.mxu0 0
          %1120 = vmatpush1.bf16.msra.mxu0 0
          %1121 = vmatprep.mubr.bf16.mxu0 0
          %1122 = vmatmul.mubr.bf16.gmra.mrb[0].mxu0 %v1033
          %v1123 = vpop.f32.mrb[0].mxu0
          %v1124 = vadd.f32 %v1039, %v1123
          %v1125 = vpop.f32.mrb[0].mxu0
          %v1126 = vpop.f32.mrb[0].mxu0
          %v1127 = vpop.f32.mrb[0].mxu0
          %1128 = vdwg.mxu0
          %v1129 = vld [vmem:[#allocation3] sm:$0xf]
          %v1130 = vld [vmem:[%s6] sm:$0xf]
          %v1131 = vld [vmem:[%s6 + $0x4] sm:$0xf]
          %v1132 = vld [vmem:[%s10 + $0x2] sm:$0x1]
          %v1134 = vlaneseq
          %v1135 = vshrl.u32 %v1134, 7
          %v1136 = vsub.s32 0, %v1135
          %v1137 = vrot.slane %v1132, %v1136
          %v1141 = vunpack.c.l.b16 %v1130
          %v1142 = vunpack.c.l.b16 %v1131
          %v1143 = vpack.c.b16 %v1142, %v1141
          %vm1145 = vcmask 130048
          %v1147 = vsel %vm1145, %v1129, 0
          %1149 = vmatprep.subr.bf16.mxu0 0
          %1150 = vmatpush1.bf16.msra.mxu0 %v1143
          %1151 = vmatprep.subr.bf16.mxu0 0
          %1152 = vmatpush1.bf16.msra.mxu0 0
          %1153 = vmatprep.subr.bf16.mxu0 0
          %1154 = vmatpush1.bf16.msra.mxu0 0
          %1155 = vmatprep.subr.bf16.mxu0 0
          %1156 = vmatpush1.bf16.msra.mxu0 0
          %1157 = vmatprep.subr.bf16.mxu0 0
          %1158 = vmatpush1.bf16.msra.mxu0 0
          %1159 = vmatprep.subr.bf16.mxu0 0
          %1160 = vmatpush1.bf16.msra.mxu0 0
          %1161 = vmatprep.subr.bf16.mxu0 0
          %1162 = vmatpush1.bf16.msra.mxu0 0
          %1163 = vmatprep.subr.bf16.mxu0 0
          %1164 = vmatpush1.bf16.msra.mxu0 0
          %1165 = vmatprep.subr.bf16.mxu0 0
          %1166 = vmatpush1.bf16.msra.mxu0 0
          %1167 = vmatprep.subr.bf16.mxu0 0
          %1168 = vmatpush1.bf16.msra.mxu0 0
          %1169 = vmatprep.subr.bf16.mxu0 0
          %1170 = vmatpush1.bf16.msra.mxu0 0
          %1171 = vmatprep.subr.bf16.mxu0 0
          %1172 = vmatpush1.bf16.msra.mxu0 0
          %1173 = vmatprep.subr.bf16.mxu0 0
          %1174 = vmatpush1.bf16.msra.mxu0 0
          %1175 = vmatprep.subr.bf16.mxu0 0
          %1176 = vmatpush1.bf16.msra.mxu0 0
          %1177 = vmatprep.subr.bf16.mxu0 0
          %1178 = vmatpush1.bf16.msra.mxu0 0
          %1179 = vmatprep.subr.bf16.mxu0 0
          %1180 = vmatpush1.bf16.msra.mxu0 0
          %1181 = vmatprep.mubr.bf16.mxu0 0
          %1182 = vmatmul.mubr.bf16.gmra.mrb[0].mxu0 %v1147
          %v1183 = vpop.f32.mrb[0].mxu0
          %v1184 = vadd.f32 %v1137, %v1183
          %v1185 = vpop.f32.mrb[0].mxu0
          %v1186 = vpop.f32.mrb[0].mxu0
          %v1187 = vpop.f32.mrb[0].mxu0
          %1188 = vdwg.mxu0
          %v1189 = vld [vmem:[#allocation9] sm:$0xf]
          %v1190 = vld [vmem:[#allocation9 + $0x4] sm:$0xf]
          %v1191 = vld [vmem:[#allocation9 + $0x8] sm:$0xf]
          %v1192 = vld [vmem:[#allocation9 + $0xc] sm:$0xf]
          %v1193 = vld [vmem:[#allocation9 + $0x10] sm:$0xf]
          %v1194 = vld [vmem:[#allocation9 + $0x14] sm:$0xf]
          %v1195 = vld [vmem:[#allocation9 + $0x18] sm:$0xf]
          %v1196 = vld [vmem:[#allocation9 + $0x1c] sm:$0xf]
          %v1197 = vpack.c.bf16 %v1184, %v1184
          %v1198 = vld [vmem:[%s10 + $0x3] sm:$0x1]
          %v1200 = vlaneseq
          %v1201 = vshrl.u32 %v1200, 7
          %v1202 = vsub.s32 0, %v1201
          %v1203 = vrot.slane %v1198, %v1202
          %v1213 = vunpack.c.l.b16 %v1189
          %v1214 = vunpack.c.l.b16 %v1190
          %v1215 = vunpack.c.l.b16 %v1191
          %v1216 = vunpack.c.l.b16 %v1192
          %v1217 = vunpack.c.l.b16 %v1193
          %v1218 = vunpack.c.l.b16 %v1194
          %v1219 = vunpack.c.l.b16 %v1195
          %v1220 = vunpack.c.l.b16 %v1196
          %v1221 = vpack.c.b16 %v1214, %v1213
          %v1222 = vpack.c.b16 %v1216, %v1215
          %v1223 = vpack.c.b16 %v1218, %v1217
          %v1224 = vpack.c.b16 %v1220, %v1219
          %vm1229 = vcmask 523264
          %v1231 = vsel %vm1229, %v1197, 0
          %1233 = vmatprep.subr.bf16.mxu0 0
          %1234 = vmatpush1.bf16.msra.mxu0 %v1221
          %1235 = vmatprep.subr.bf16.mxu0 0
          %1236 = vmatpush1.bf16.msra.mxu0 %v1222
          %1237 = vmatprep.subr.bf16.mxu0 0
          %1238 = vmatpush1.bf16.msra.mxu0 %v1223
          %1239 = vmatprep.subr.bf16.mxu0 0
          %1240 = vmatpush1.bf16.msra.mxu0 %v1224
          %1241 = vmatprep.subr.bf16.mxu0 0
          %1242 = vmatpush1.bf16.msra.mxu0 0
          %1243 = vmatprep.subr.bf16.mxu0 0
          %1244 = vmatpush1.bf16.msra.mxu0 0
          %1245 = vmatprep.subr.bf16.mxu0 0
          %1246 = vmatpush1.bf16.msra.mxu0 0
          %1247 = vmatprep.subr.bf16.mxu0 0
          %1248 = vmatpush1.bf16.msra.mxu0 0
          %1249 = vmatprep.subr.bf16.mxu0 0
          %1250 = vmatpush1.bf16.msra.mxu0 0
          %1251 = vmatprep.subr.bf16.mxu0 0
          %1252 = vmatpush1.bf16.msra.mxu0 0
          %1253 = vmatprep.subr.bf16.mxu0 0
          %1254 = vmatpush1.bf16.msra.mxu0 0
          %1255 = vmatprep.subr.bf16.mxu0 0
          %1256 = vmatpush1.bf16.msra.mxu0 0
          %1257 = vmatprep.subr.bf16.mxu0 0
          %1258 = vmatpush1.bf16.msra.mxu0 0
          %1259 = vmatprep.subr.bf16.mxu0 0
          %1260 = vmatpush1.bf16.msra.mxu0 0
          %1261 = vmatprep.subr.bf16.mxu0 0
          %1262 = vmatpush1.bf16.msra.mxu0 0
          %1263 = vmatprep.subr.bf16.mxu0 0
          %1264 = vmatpush1.bf16.msra.mxu0 0
          %1265 = vmatprep.mubr.bf16.mxu0 0
          %1266 = vmatmul.mubr.bf16.gmra.mrb[0].mxu0 %v1231
          %v1267 = vpop.f32.mrb[0].mxu0
          %v1268 = vadd.f32 %v1203, %v1267
          %v1269 = vpop.f32.mrb[0].mxu0
          %v1270 = vpop.f32.mrb[0].mxu0
          %v1271 = vpop.f32.mrb[0].mxu0
          %1272 = vdwg.mxu0
          %v1273 = vld [vmem:[%s8] sm:$0xf]
          %v1274 = vld [vmem:[%s8 + $0x4] sm:$0xf]
          %v1275 = vld [vmem:[%s8 + $0x8] sm:$0xf]
          %v1276 = vld [vmem:[%s8 + $0xc] sm:$0xf]
          %v1277 = vld [vmem:[%s8 + $0x10] sm:$0xf]
          %v1278 = vld [vmem:[%s8 + $0x14] sm:$0xf]
          %v1279 = vld [vmem:[%s8 + $0x18] sm:$0xf]
          %v1280 = vld [vmem:[%s8 + $0x1c] sm:$0xf]
          %v1281 = vld [vmem:[%s8 + $0x20] sm:$0xf]
          %v1282 = vld [vmem:[%s8 + $0x24] sm:$0xf]
          %v1283 = vld [vmem:[%s8 + $0x28] sm:$0xf]
          %v1284 = vld [vmem:[%s8 + $0x2c] sm:$0xf]
          %v1285 = vld [vmem:[%s8 + $0x30] sm:$0xf]
          %v1286 = vld [vmem:[%s8 + $0x34] sm:$0xf]
          %v1287 = vld [vmem:[%s8 + $0x38] sm:$0xf]
          %v1288 = vld [vmem:[%s8 + $0x3c] sm:$0xf]
          %v1289 = vpack.c.bf16 %v1268, %v1268
          %v1290 = vpack.c.bf16 %v1124, %v1124
          %v1299 = vunpack.c.l.b16 %v1281
          %v1300 = vunpack.c.l.b16 %v1282
          %v1301 = vunpack.c.l.b16 %v1283
          %v1302 = vunpack.c.l.b16 %v1284
          %v1303 = vunpack.c.l.b16 %v1285
          %v1304 = vunpack.c.l.b16 %v1286
          %v1305 = vunpack.c.l.b16 %v1287
          %v1306 = vunpack.c.l.b16 %v1288
          %v1307 = vpack.c.b16 %v1300, %v1299
          %v1308 = vpack.c.b16 %v1302, %v1301
          %v1309 = vpack.c.b16 %v1304, %v1303
          %v1310 = vpack.c.b16 %v1306, %v1305
          %v1316 = vsel %vm1229, %v1290, 0
          %1318 = vmatprep.subr.bf16.mxu0 0
          %1319 = vmatpush1.bf16.msra.mxu0 %v1307
          %1320 = vmatprep.subr.bf16.mxu0 0
          %1321 = vmatpush1.bf16.msra.mxu0 %v1308
          %1322 = vmatprep.subr.bf16.mxu0 0
          %1323 = vmatpush1.bf16.msra.mxu0 %v1309
          %1324 = vmatprep.subr.bf16.mxu0 0
          %1325 = vmatpush1.bf16.msra.mxu0 %v1310
          %1326 = vmatprep.subr.bf16.mxu0 0
          %1327 = vmatpush1.bf16.msra.mxu0 0
          %1328 = vmatprep.subr.bf16.mxu0 0
          %1329 = vmatpush1.bf16.msra.mxu0 0
          %1330 = vmatprep.subr.bf16.mxu0 0
          %1331 = vmatpush1.bf16.msra.mxu0 0
          %1332 = vmatprep.subr.bf16.mxu0 0
          %1333 = vmatpush1.bf16.msra.mxu0 0
          %1334 = vmatprep.subr.bf16.mxu0 0
          %1335 = vmatpush1.bf16.msra.mxu0 0
          %1336 = vmatprep.subr.bf16.mxu0 0
          %1337 = vmatpush1.bf16.msra.mxu0 0
          %1338 = vmatprep.subr.bf16.mxu0 0
          %1339 = vmatpush1.bf16.msra.mxu0 0
          %1340 = vmatprep.subr.bf16.mxu0 0
          %1341 = vmatpush1.bf16.msra.mxu0 0
          %1342 = vmatprep.subr.bf16.mxu0 0
          %1343 = vmatpush1.bf16.msra.mxu0 0
          %1344 = vmatprep.subr.bf16.mxu0 0
          %1345 = vmatpush1.bf16.msra.mxu0 0
          %1346 = vmatprep.subr.bf16.mxu0 0
          %1347 = vmatpush1.bf16.msra.mxu0 0
          %1348 = vmatprep.subr.bf16.mxu0 0
          %1349 = vmatpush1.bf16.msra.mxu0 0
          %1350 = vmatprep.mubr.bf16.mxu0 0
          %1351 = vmatmul.mubr.bf16.gmra.mrb[0].mxu0 %v1316
          %v1352 = vpop.f32.mrb[0].mxu0
          %v1353 = vadd.f32 0.0, %v1352
          %v1354 = vpop.f32.mrb[0].mxu0
          %v1355 = vpop.f32.mrb[0].mxu0
          %v1356 = vpop.f32.mrb[0].mxu0
          %1357 = vdwg.mxu0
          %v1366 = vunpack.c.l.b16 %v1273
          %v1367 = vunpack.c.l.b16 %v1274
          %v1368 = vunpack.c.l.b16 %v1275
          %v1369 = vunpack.c.l.b16 %v1276
          %v1370 = vunpack.c.l.b16 %v1277
          %v1371 = vunpack.c.l.b16 %v1278
          %v1372 = vunpack.c.l.b16 %v1279
          %v1373 = vunpack.c.l.b16 %v1280
          %v1374 = vpack.c.b16 %v1367, %v1366
          %v1375 = vpack.c.b16 %v1369, %v1368
          %v1376 = vpack.c.b16 %v1371, %v1370
          %v1377 = vpack.c.b16 %v1373, %v1372
          %v1383 = vsel %vm1229, %v1289, 0
          %1385 = vmatprep.subr.bf16.mxu0 0
          %1386 = vmatpush1.bf16.msra.mxu0 %v1374
          %1387 = vmatprep.subr.bf16.mxu0 0
          %1388 = vmatpush1.bf16.msra.mxu0 %v1375
          %1389 = vmatprep.subr.bf16.mxu0 0
          %1390 = vmatpush1.bf16.msra.mxu0 %v1376
          %1391 = vmatprep.subr.bf16.mxu0 0
          %1392 = vmatpush1.bf16.msra.mxu0 %v1377
          %1393 = vmatprep.subr.bf16.mxu0 0
          %1394 = vmatpush1.bf16.msra.mxu0 0
          %1395 = vmatprep.subr.bf16.mxu0 0
          %1396 = vmatpush1.bf16.msra.mxu0 0
          %1397 = vmatprep.subr.bf16.mxu0 0
          %1398 = vmatpush1.bf16.msra.mxu0 0
          %1399 = vmatprep.subr.bf16.mxu0 0
          %1400 = vmatpush1.bf16.msra.mxu0 0
          %1401 = vmatprep.subr.bf16.mxu0 0
          %1402 = vmatpush1.bf16.msra.mxu0 0
          %1403 = vmatprep.subr.bf16.mxu0 0
          %1404 = vmatpush1.bf16.msra.mxu0 0
          %1405 = vmatprep.subr.bf16.mxu0 0
          %1406 = vmatpush1.bf16.msra.mxu0 0
          %1407 = vmatprep.subr.bf16.mxu0 0
          %1408 = vmatpush1.bf16.msra.mxu0 0
          %1409 = vmatprep.subr.bf16.mxu0 0
          %1410 = vmatpush1.bf16.msra.mxu0 0
          %1411 = vmatprep.subr.bf16.mxu0 0
          %1412 = vmatpush1.bf16.msra.mxu0 0
          %1413 = vmatprep.subr.bf16.mxu0 0
          %1414 = vmatpush1.bf16.msra.mxu0 0
          %1415 = vmatprep.subr.bf16.mxu0 0
          %1416 = vmatpush1.bf16.msra.mxu0 0
          %1417 = vmatprep.mubr.bf16.mxu0 0
          %1418 = vmatmul.mubr.bf16.gmra.mrb[0].mxu0 %v1383
          %v1419 = vpop.f32.mrb[0].mxu0
          %v1420 = vadd.f32 %v1353, %v1419
          %v1421 = vpop.f32.mrb[0].mxu0
          %v1422 = vpop.f32.mrb[0].mxu0
          %v1423 = vpop.f32.mrb[0].mxu0
          %1424 = vdwg.mxu0
          %v1425 = vld [vmem:[%s10 + $0x4] sm:$0x1]
          %v1427 = vlaneseq
          %v1428 = vshrl.u32 %v1427, 7
          %v1429 = vsub.s32 0, %v1428
          %v1430 = vrot.slane %v1425, %v1429
          %v1432 = vadd.f32 %v1420, %v1430
          %v1433 = vmax.f32 %v1432, 0.0
          %v1434 = vld [vmem:[#allocation11] sm:$0xf]
          %v1435 = vld [vmem:[#allocation11 + $0x4] sm:$0xf]
          %v1436 = vld [vmem:[#allocation11 + $0x8] sm:$0xf]
          %v1437 = vld [vmem:[#allocation11 + $0xc] sm:$0xf]
          %v1438 = vld [vmem:[#allocation11 + $0x10] sm:$0xf]
          %v1439 = vld [vmem:[#allocation11 + $0x14] sm:$0xf]
          %v1440 = vld [vmem:[#allocation11 + $0x18] sm:$0xf]
          %v1441 = vld [vmem:[#allocation11 + $0x1c] sm:$0xf]
          %v1442 = vpack.c.bf16 %v1433, %v1433
          %v1443 = vld [vmem:[%s10 + $0x5] sm:$0x1]
          %v1445 = vlaneseq
          %v1446 = vshrl.u32 %v1445, 7
          %v1447 = vsub.s32 0, %v1446
          %v1448 = vrot.slane %v1443, %v1447
          %v1458 = vunpack.c.l.b16 %v1434
          %v1459 = vunpack.c.l.b16 %v1435
          %v1460 = vunpack.c.l.b16 %v1436
          %v1461 = vunpack.c.l.b16 %v1437
          %v1462 = vunpack.c.l.b16 %v1438
          %v1463 = vunpack.c.l.b16 %v1439
          %v1464 = vunpack.c.l.b16 %v1440
          %v1465 = vunpack.c.l.b16 %v1441
          %v1466 = vpack.c.b16 %v1459, %v1458
          %v1467 = vpack.c.b16 %v1461, %v1460
          %v1468 = vpack.c.b16 %v1463, %v1462
          %v1469 = vpack.c.b16 %v1465, %v1464
          %v1475 = vsel %vm1229, %v1442, 0
          %1477 = vmatprep.subr.bf16.mxu0 0
          %1478 = vmatpush1.bf16.msra.mxu0 %v1466
          %1479 = vmatprep.subr.bf16.mxu0 0
          %1480 = vmatpush1.bf16.msra.mxu0 %v1467
          %1481 = vmatprep.subr.bf16.mxu0 0
          %1482 = vmatpush1.bf16.msra.mxu0 %v1468
          %1483 = vmatprep.subr.bf16.mxu0 0
          %1484 = vmatpush1.bf16.msra.mxu0 %v1469
          %1485 = vmatprep.subr.bf16.mxu0 0
          %1486 = vmatpush1.bf16.msra.mxu0 0
          %1487 = vmatprep.subr.bf16.mxu0 0
          %1488 = vmatpush1.bf16.msra.mxu0 0
          %1489 = vmatprep.subr.bf16.mxu0 0
          %1490 = vmatpush1.bf16.msra.mxu0 0
          %1491 = vmatprep.subr.bf16.mxu0 0
          %1492 = vmatpush1.bf16.msra.mxu0 0
          %1493 = vmatprep.subr.bf16.mxu0 0
          %1494 = vmatpush1.bf16.msra.mxu0 0
          %1495 = vmatprep.subr.bf16.mxu0 0
          %1496 = vmatpush1.bf16.msra.mxu0 0
          %1497 = vmatprep.subr.bf16.mxu0 0
          %1498 = vmatpush1.bf16.msra.mxu0 0
          %1499 = vmatprep.subr.bf16.mxu0 0
          %1500 = vmatpush1.bf16.msra.mxu0 0
          %1501 = vmatprep.subr.bf16.mxu0 0
          %1502 = vmatpush1.bf16.msra.mxu0 0
          %1503 = vmatprep.subr.bf16.mxu0 0
          %1504 = vmatpush1.bf16.msra.mxu0 0
          %1505 = vmatprep.subr.bf16.mxu0 0
          %1506 = vmatpush1.bf16.msra.mxu0 0
          %1507 = vmatprep.subr.bf16.mxu0 0
          %1508 = vmatpush1.bf16.msra.mxu0 0
          %1509 = vmatprep.mubr.bf16.mxu0 0
          %1510 = vmatmul.mubr.bf16.gmra.mrb[0].mxu0 %v1475
          %v1511 = vpop.f32.mrb[0].mxu0
          %v1512 = vadd.f32 %v1448, %v1511
          %v1513 = vpop.f32.mrb[0].mxu0
          %v1514 = vpop.f32.mrb[0].mxu0
          %v1515 = vpop.f32.mrb[0].mxu0
          %1516 = vdwg.mxu0
          %v1517 = vxor.u32 %v1512, 2147483648
          %v1518 = vmul.f32 %v1517, 1.442695
          %v1519 = vpow.pop %v1518
          %v1520 = vadd.f32 %v1519, 1.0
          %v1521 = vrcp.pop %v1520
          %v1522 = vmul.f32 1.0, %v1521
          %1523 = vst [vmem:[#allocation12] sm:$0xff] %v1522
        $region88: #{tpu_custom_call.1} parent=63 // pred_fallthru
          _
        // Predicated region
        $region89: #{tpu_custom_call.1} parent=63 // pred_check
          %p1524 = pneg %p282
        $region90: #{tpu_custom_call.1} parent=63 // pred_check_branch
          %1526 = sbr.rel (%p1524) target = $region92
        $region91: #{tpu_custom_call.1} parent=63 // pred_region
          %s1528 = ssub.s32 128, 128
          %1529 = vsyncadd [#allocation5], %s1528
          %s1531 = sshll.u32 [#allocation12], 4
          %s1532 = int_to_ptr.vmem [resolvable:$true] %s1531
          %1534 = dma.vmem_to_hbm [thread:$0]  %s1532, 128, %s11, [#allocation5]
        $region92: #{tpu_custom_call.1} parent=63 // pred_fallthru
          _
        // Predicated region
        $region93: #{tpu_custom_call.1} parent=63 // pred_check
          %p1535 = pneg %p282
        $region94: #{tpu_custom_call.1} parent=63 // pred_check_branch
          %1537 = sbr.rel (%p1535) target = $region96
        $region95: #{tpu_custom_call.1} parent=63 // pred_region
          %1538 = dma.done [#allocation5], 128
        $region96: #{tpu_custom_call.1} parent=63 // pred_fallthru
          _
      $region64: #{tpu_custom_call.1} parent=5 // pred_fallthru
        _
      %p1539 = scmp.le.s32.totalorder 2, %s23
      // Predicated region
      $region97: #{tpu_custom_call.1} parent=5 // pred_check
        %p1540 = pneg %p1539
      $region98: #{tpu_custom_call.1} parent=5 // pred_check_branch
        %1542 = sbr.rel (%p1540) target = $region100
      $region99: #{tpu_custom_call.1} parent=5 // pred_region
        %s1543 = ssub.s32 %s23, 2
      $region100: #{tpu_custom_call.1} parent=5 // pred_fallthru
        _
    $region6: #{tpu_custom_call.1} parent=1 // loop_footer
      %s27 = sadd.s32 1, %s23
    $region7: #{tpu_custom_call.1} parent=1 // loop_footer_branch
      %22 = sbr.rel target = $region3
    $region8: #{tpu_custom_call.1} parent=1 // loop_exit
      _
    %1544 = vsyncpa [#allocation4], 1
    %s1545 = scalar_lea.sflag [#allocation4], 1
    %1546 = vsyncpa %s1545, 1
    %1547 = vsyncpa [#allocation7], 1
    %s1548 = scalar_lea.sflag [#allocation7], 1
    %1549 = vsyncpa %s1548, 1
    %1550 = vsyncpa [#allocation10], 1
    %1551 = vsyncpa [#allocation5], 1
    %s1552 = scalar_lea.sflag [#allocation5], 1
    %1553 = vsyncpa %s1552, 1

</llo_original>
